<compile_context>
chip_gen: v7x
topology: tpu7x:2x2x1
jax: 0.10.0
libtpu: 0.0.40
codegen_flags: <defaults>
</compile_context>

<pallas_src>
import numpy as np
import jax
import jax.numpy as jnp
from jax.experimental import pallas as pl
from jax.experimental.pallas import tpu as pltpu

# ------------------------- small, module-consistent sizes -------------------------
B = 2          # batch
L = 8          # stream length
T = L - 1      # signature stream steps
IC = 4         # input_channels
NTF = 3        # num_time_features
EMB = 6        # embedding_dim (gated-addition target width)
OC = 4         # output_channels (conv out channels)
HLSTM = 8      # hidden_dim_lstm[-1]
HID = 16       # hidden_dim (FFN)
OUT = 3        # output_dim
F = IC + NTF   # feature dim of x
LANES = 128


def logsig_channels(c):      # == signatory.logsignature_channels(c, depth=2)
    return c + c * (c - 1) // 2


SIG1 = logsig_channels(OC)       # LSTM input size (10)
SIG2 = logsig_channels(HLSTM)    # final log-signature width (36)
GATED_IN = SIG2 + NTF            # fc_scale input size (39)


# --------------------------- packed parameter-slab layout ---------------------------
def _layout_entries():
    return [
        # learned parameters (kernel layout: row-major, used as  x @ W)
        ('wconv', 3 * IC, OC), ('bconv', 1, OC),
        ('wih', SIG1, 4 * HLSTM), ('whh', HLSTM, 4 * HLSTM), ('blstm', 1, 4 * HLSTM),
        ('ws', GATED_IN, EMB), ('bs', 1, EMB), ('scaler', 1, EMB),
        ('w1', EMB, HID), ('b1', 1, HID),
        ('w2', HID, HID), ('b2', 1, HID),
        ('w3', HID, OUT), ('b3', 1, OUT),
        # constant data-movement / selection matrices (also baked at init time)
        ('shift_prev', B * L, B * L), ('shift_next', B * L, B * L),
        ('m_prefix', B * T, B * L), ('m_delta', B * T, B * L), ('btril', B * T, B * T),
        ('e4', OC, OC * OC), ('f4', OC, OC * OC),
        ('sel4', OC * OC, OC * (OC - 1) // 2),
        ('e8', HLSTM, HLSTM * HLSTM), ('f8', HLSTM, HLSTM * HLSTM),
        ('sel8', HLSTM * HLSTM, HLSTM * (HLSTM - 1) // 2),
        ('selp2', B * (T - 1), B * T), ('seld2', B * (T - 1), B * T),
        ('sumb', B, B * (T - 1)),
    ]


def _build_layout():
    layout, row = {}, 0
    for name, r, c in _layout_entries():
        assert c <= LANES
        layout[name] = (row, r, c)
        row += ((r + 7) // 8) * 8          # 8-sublane aligned block starts
    return layout, row


_LAYOUT, _SLAB_ROWS = _build_layout()      # ~408 rows x 128 lanes x f32 ≈ 205 KiB


def _lyndon_pairs(c):
    return [(i, j) for i in range(c) for j in range(i + 1, c)]


def _constant_blocks():
    """0/±1/±0.5 constant matrices that turn shifts, Levy terms, cumsums and
    per-batch reductions into plain MXU contractions."""
    blks = {}

    # conv taps: prev / next row within each batch block of the (B*L, IC) input
    sp = np.zeros((B * L, B * L), np.float32)
    sn = np.zeros((B * L, B * L), np.float32)
    for b in range(B):
        for l in range(L):
            r = b * L + l
            if l > 0:
                sp[r, r - 1] = 1.0
            if l < L - 1:
                sn[r, r + 1] = 1.0
    blks['shift_prev'], blks['shift_next'] = sp, sn

    # streamed signature: conv rows (b-major, B*L) -> t-major (B*T) prefix/delta rows
    mp = np.zeros((B * T, B * L), np.float32)
    md = np.zeros((B * T, B * L), np.float32)
    bt = np.zeros((B * T, B * T), np.float32)
    for t in range(T):
        for b in range(B):
            r = t * B + b
            mp[r, b * L + t] += 1.0          # conv[b, t]
            mp[r, b * L + 0] -= 1.0          # - conv[b, 0]
            md[r, b * L + t + 1] += 1.0      # conv[b, t+1]
            md[r, b * L + t] -= 1.0          # - conv[b, t]
            for s in range(t + 1):           # per-batch cumulative sum over stream
                bt[r, s * B + b] = 1.0
    blks['m_prefix'], blks['m_delta'], blks['btril'] = mp, md, bt

    # outer-product expansion + Lyndon (i<j) antisymmetric selection, ±0.5 baked in
    def efsel(c):
        e = np.zeros((c, c * c), np.float32)
        f = np.zeros((c, c * c), np.float32)
        for i in range(c):
            for j in range(c):
                e[i, i * c + j] = 1.0        # (P @ E)[:, i*c+j] = P[:, i]
                f[j, i * c + j] = 1.0        # (D @ F)[:, i*c+j] = D[:, j]
        pairs = _lyndon_pairs(c)
        sel = np.zeros((c * c, len(pairs)), np.float32)
        for k, (i, j) in enumerate(pairs):
            sel[i * c + j, k] = 0.5
            sel[j * c + i, k] = -0.5
        return e, f, sel

    blks['e4'], blks['f4'], blks['sel4'] = efsel(OC)
    blks['e8'], blks['f8'], blks['sel8'] = efsel(HLSTM)

    # final signature: hs stacked t-major (T*B, H) -> (B*(T-1)) term rows + batch sum
    selp = np.zeros((B * (T - 1), B * T), np.float32)
    seld = np.zeros((B * (T - 1), B * T), np.float32)
    sumb = np.zeros((B, B * (T - 1)), np.float32)
    for t in range(1, T):
        for b in range(B):
            r = (t - 1) * B + b
            selp[r, (t - 1) * B + b] += 1.0   # h[t-1]
            selp[r, 0 * B + b] -= 1.0         # - h[0]
            seld[r, t * B + b] += 1.0         # h[t]
            seld[r, (t - 1) * B + b] -= 1.0   # - h[t-1]
            sumb[b, r] = 1.0
    blks['selp2'], blks['seld2'], blks['sumb'] = selp, seld, sumb
    return blks


# --------------------------------- fused kernel ------------------------------------
def _fused_kernel(x_ref, p_ref, out_ref):
    f32 = jnp.float32
    H = HLSTM

    def blk(name):
        r, nr, nc = _LAYOUT[name]
        return p_ref[r:r + nr, 0:nc]          # static slice of the packed slab

    def mm(a, b):
        return jnp.dot(a, b, preferred_element_type=f32)

    x = x_ref[...]                            # (B, L, F)
    Bx = x.shape[0]

    # ---- time-feature max-pool (torch .max(1)[0]) ----
    tmax = jnp.max(x[:, :, IC:IC + NTF], axis=1)                 # (B, NTF)

    # ---- Conv1d(k=3, stride=1, pad=1) + tanh: one lane-dense 2-D matmul ----
    xin = x[:, :, :IC].reshape(Bx * L, IC)                       # (B*L, IC), b-major
    left = mm(blk('shift_prev'), xin)                            # x[l-1] tap (zero pad)
    right = mm(blk('shift_next'), xin)                           # x[l+1] tap (zero pad)
    xcat = jnp.concatenate([left, xin, right], axis=-1)          # (B*L, 3*IC)
    conv = jnp.tanh(mm(xcat, blk('wconv')) + blk('bconv'))       # (B*L, OC)

    # ---- streamed depth-2 log-signature (Lyndon pairs) as constant contractions ----
    prefix = mm(blk('m_prefix'), conv)                           # (B*T, OC), t-major
    delta = mm(blk('m_delta'), conv)                             # (B*T, OC)
    lvl1 = prefix + delta                                        # conv[t+1]-conv[0]
    outer = mm(prefix, blk('e4')) * mm(delta, blk('f4'))         # (B*T, OC*OC)
    anti = mm(outer, blk('sel4'))                                # 0.5*(p_i d_j - d_i p_j)
    area = mm(blk('btril'), anti)                                # streamed cumsum over t
    seq = jnp.concatenate([lvl1, area], axis=-1)                 # (B*T, SIG1)

    # ---- LSTM: input projection hoisted; 7-step recurrence statically unrolled ----
    whh = blk('whh')                                             # (H, 4H), [i,f,o,g] cols
    xg = mm(seq, blk('wih')) + blk('blstm')                      # (B*T, 4H), bias folded
    h = jnp.zeros((Bx, H), f32)
    c = jnp.zeros((Bx, H), f32)
    hs = []
    for t in range(T):                                           # T = 7, static unroll
        gates = xg[t * Bx:(t + 1) * Bx, :] + mm(h, whh)          # contiguous sublane slice
        sg = jax.nn.sigmoid(gates[:, :3 * H])                    # one EUP issue: i|f|o
        g_g = jnp.tanh(gates[:, 3 * H:])
        c = sg[:, H:2 * H] * c + sg[:, :H] * g_g
        h = sg[:, 2 * H:3 * H] * jnp.tanh(c)
        hs.append(h)                                             # stays in vregs

    # ---- depth-2 log-signature, stream=False: final value via one MXU reduction ----
    hstack = jnp.concatenate(hs, axis=0)                         # (T*B, H), t-major
    p2 = mm(blk('selp2'), hstack)                                # h[t-1]-h[0]
    d2 = mm(blk('seld2'), hstack)                                # h[t]-h[t-1]
    o2 = mm(p2, blk('e8')) * mm(d2, blk('f8'))                   # (B*(T-1), H*H)
    area2 = mm(blk('sumb'), mm(o2, blk('sel8')))                 # (B, 28): Lyndon + t-sum
    sig2 = jnp.concatenate([hs[-1] - hs[0], area2], axis=-1)     # (B, SIG2)

    # ---- head: gated addition + 3-layer FFN (dropout == identity, eval mode) ----
    gate_in = jnp.concatenate([sig2, tmax], axis=-1)             # (B, SIG2+NTF)
    g = jnp.tanh(mm(gate_in, blk('ws')) + blk('bs')) * blk('scaler')
    h1 = jnp.maximum(mm(g, blk('w1')) + blk('b1'), 0.0)
    h2 = jnp.maximum(mm(h1, blk('w2')) + blk('b2'), 0.0)
    out_ref[...] = mm(h2, blk('w3')) + blk('b3')


# ------------------------------- pallas_call wrapper --------------------------------
def stacked_deepsignet_forward(x, slab):
    """x: (B, L, F) float32; slab: packed (rows, 128) parameter slab."""
    vspec = pl.BlockSpec(memory_space=pltpu.MemorySpace.VMEM)
    return pl.pallas_call(
        _fused_kernel,
        out_shape=jax.ShapeDtypeStruct((x.shape[0], OUT), jnp.float32),
        in_specs=[vspec, vspec],
        out_specs=pl.BlockSpec(memory_space=pltpu.MemorySpace.VMEM),
    )(x, slab)


# ---------------------------------- parameters --------------------------------------
def init_params(key):
    """Torch-layout parameters (exactly what the nn.Module would hold)."""
    ks = jax.random.split(key, 16)

    def u(k, shape, scale=0.3):
        return jax.random.uniform(k, shape, jnp.float32, -1.0, 1.0) * scale

    return dict(
        conv_w=u(ks[0], (OC, IC, 3)),
        conv_b=u(ks[1], (OC,)),
        lstm_w_ih=u(ks[2], (4 * HLSTM, SIG1)),
        lstm_w_hh=u(ks[3], (4 * HLSTM, HLSTM)),
        lstm_b_ih=u(ks[4], (4 * HLSTM,)),
        lstm_b_hh=u(ks[5], (4 * HLSTM,)),
        fc_scale_w=u(ks[6], (EMB, GATED_IN)),
        fc_scale_b=u(ks[7], (EMB,)),
        # the PyTorch module inits `scaler` to zeros; nonzero here so the output
        # actually depends on the input (shape matches: (1, EMB)).
        scaler=u(ks[8], (1, EMB)),
        fc1_w=u(ks[9], (HID, EMB)),
        fc1_b=u(ks[10], (HID,)),
        fc2_w=u(ks[11], (HID, HID)),
        fc2_b=u(ks[12], (HID,)),
        fc3_w=u(ks[13], (OUT, HID)),
        fc3_b=u(ks[14], (OUT,)),
    )


def prepare_params(p):
    """One-time re-layout: torch-shaped params + constant matrices -> ONE packed slab."""
    slab = np.zeros((_SLAB_ROWS, LANES), np.float32)

    def put(name, arr):
        r, nr, nc = _LAYOUT[name]
        a = np.asarray(arr, np.float32)
        assert a.shape == (nr, nc), (name, a.shape, (nr, nc))
        slab[r:r + nr, :nc] = a

    # Conv1d: stack the 3 taps row-wise so conv is a single (B*L,3IC)@(3IC,OC) matmul.
    w = np.asarray(p['conv_w'])                                     # (OC, IC, 3)
    put('wconv', np.concatenate([w[:, :, k].T for k in range(3)], axis=0))
    put('bconv', np.asarray(p['conv_b']).reshape(1, -1))

    # LSTM: transpose + gate permutation [i,f,g,o] -> [i,f,o,g]; merge biases.
    H = HLSTM

    def perm_gates(m):                                              # m: (4H, X)
        return np.concatenate([m[:2 * H], m[3 * H:4 * H], m[2 * H:3 * H]], axis=0)

    put('wih', perm_gates(np.asarray(p['lstm_w_ih'])).T)            # (SIG1, 4H)
    put('whh', perm_gates(np.asarray(p['lstm_w_hh'])).T)            # (H, 4H)
    b_comb = (np.asarray(p['lstm_b_ih']) + np.asarray(p['lstm_b_hh'])).reshape(-1, 1)
    put('blstm', perm_gates(b_comb).reshape(1, -1))

    put('ws', np.asarray(p['fc_scale_w']).T)                        # (GATED_IN, EMB)
    put('bs', np.asarray(p['fc_scale_b']).reshape(1, -1))
    put('scaler', np.asarray(p['scaler']))
    put('w1', np.asarray(p['fc1_w']).T)
    put('b1', np.asarray(p['fc1_b']).reshape(1, -1))
    put('w2', np.asarray(p['fc2_w']).T)
    put('b2', np.asarray(p['fc2_b']).reshape(1, -1))
    put('w3', np.asarray(p['fc3_w']).T)
    put('b3', np.asarray(p['fc3_b']).reshape(1, -1))

    for name, arr in _constant_blocks().items():
        put(name, arr)

    return jnp.asarray(slab)


# ------------------------------ pure-JAX reference ----------------------------------
def _ref_logsig2_stream(p):
    p0 = p[:, :1, :]
    disp = p - p0
    lvl1 = disp[:, 1:, :]
    prefix = disp[:, :-1, :]
    delta = p[:, 1:, :] - p[:, :-1, :]
    term = 0.5 * (prefix[:, :, :, None] * delta[:, :, None, :]
                  - delta[:, :, :, None] * prefix[:, :, None, :])
    area = jnp.cumsum(term, axis=1)
    c = p.shape[-1]
    cols = [area[:, :, i, j] for i in range(c) for j in range(i + 1, c)]
    return jnp.concatenate([lvl1, jnp.stack(cols, axis=-1)], axis=-1)


def _ref_forward(x, params):
    xp = jnp.pad(x[:, :, :IC], ((0, 0), (1, 1), (0, 0)))
    w = params['conv_w']
    y = sum(jnp.einsum('blc,oc->blo', xp[:, k:k + L, :], w[:, :, k]) for k in range(3))
    out = jnp.tanh(y + params['conv_b'])
    out = _ref_logsig2_stream(out)

    w_ih, w_hh = params['lstm_w_ih'], params['lstm_w_hh']
    b = params['lstm_b_ih'] + params['lstm_b_hh']
    H = HLSTM
    h = jnp.zeros((x.shape[0], H))
    c = jnp.zeros((x.shape[0], H))
    hs = []
    for t in range(out.shape[1]):
        g = out[:, t, :] @ w_ih.T + h @ w_hh.T + b
        i = jax.nn.sigmoid(g[:, :H])
        f = jax.nn.sigmoid(g[:, H:2 * H])
        gg = jnp.tanh(g[:, 2 * H:3 * H])
        o = jax.nn.sigmoid(g[:, 3 * H:])
        c = f * c + i * gg
        h = o * jnp.tanh(c)
        hs.append(h)
    out = jnp.stack(hs, axis=1)
    out = _ref_logsig2_stream(out)[:, -1, :]

    tmax = jnp.max(x[:, :, IC:IC + NTF], axis=1)
    gated = jnp.concatenate([out, tmax], axis=1)
    gated = jnp.tanh(gated @ params['fc_scale_w'].T + params['fc_scale_b']) * params['scaler']
    h1 = jnp.maximum(gated @ params['fc1_w'].T + params['fc1_b'], 0.0)
    h2 = jnp.maximum(h1 @ params['fc2_w'].T + params['fc2_b'], 0.0)
    return h2 @ params['fc3_w'].T + params['fc3_b']


# --------------------------------------- main ---------------------------------------
if __name__ == "__main__":
    key = jax.random.PRNGKey(0)
    kx, kp = jax.random.split(key)
    x = jax.random.normal(kx, (B, L, F), jnp.float32)
    params = init_params(kp)
    slab = prepare_params(params)        # one-time packing / layout work (init time)

    fwd = jax.jit(stacked_deepsignet_forward)
    out = jax.block_until_ready(fwd(x, slab))
    assert out.shape == (B, OUT)

    ref = _ref_forward(x, params)
    np.testing.assert_allclose(np.asarray(out), np.asarray(ref), rtol=1e-2, atol=2e-3)

    print("KERNEL_OK")
</pallas_src>

<mosaic_0001>
module attributes {stable_mosaic.version = 11 : i64} {
  func.func @_fused_kernel(%arg0: memref<2x8x7xf32, #tpu.memory_space<vmem>>, %arg1: memref<408x128xf32, #tpu.memory_space<vmem>>, %arg2: memref<2x3xf32, #tpu.memory_space<vmem>>) attributes {dimension_semantics = [], scalar_prefetch = 0 : i64, scratch_operands = 0 : i64, tpu.core_type = #tpu.core_type<tc>} {
    %c0 = arith.constant 0 : index
    %c0_0 = arith.constant 0 : index
    %c0_1 = arith.constant 0 : index
    %0 = vector.load %arg0[%c0, %c0_0, %c0_1] : memref<2x8x7xf32, #tpu.memory_space<vmem>>, vector<2x8x7xf32>
    %1 = vector.extract_strided_slice %0 {offsets = [0, 0, 4], sizes = [2, 8, 3], strides = [1, 1, 1]} : vector<2x8x7xf32> to vector<2x8x3xf32>
    %cst = arith.constant dense<0xFF800000> : vector<2x3xf32>
    %2 = vector.multi_reduction <maximumf>, %1, %cst [1] : vector<2x8x3xf32> to vector<2x3xf32>
    %3 = vector.extract_strided_slice %0 {offsets = [0, 0, 0], sizes = [2, 8, 4], strides = [1, 1, 1]} : vector<2x8x7xf32> to vector<2x8x4xf32>
    %4 = vector.shape_cast %3 : vector<2x8x4xf32> to vector<16x4xf32>
    %c176 = arith.constant 176 : index
    %c0_2 = arith.constant 0 : index
    %5 = vector.load %arg1[%c176, %c0_2] : memref<408x128xf32, #tpu.memory_space<vmem>>, vector<16x16xf32>
    %cst_3 = arith.constant dense<0.000000e+00> : vector<16x4xf32>
    %6 = tpu.matmul %5, %4, %cst_3 {dimension_numbers = #tpu.dot_dimension_numbers<[1], [0], [0], [1], [0, 0, 1, 1], [], []>} : vector<16x16xf32>, vector<16x4xf32>, vector<16x4xf32> -> vector<16x4xf32>
    %c192 = arith.constant 192 : index
    %c0_4 = arith.constant 0 : index
    %7 = vector.load %arg1[%c192, %c0_4] : memref<408x128xf32, #tpu.memory_space<vmem>>, vector<16x16xf32>
    %cst_5 = arith.constant dense<0.000000e+00> : vector<16x4xf32>
    %8 = tpu.matmul %7, %4, %cst_5 {dimension_numbers = #tpu.dot_dimension_numbers<[1], [0], [0], [1], [0, 0, 1, 1], [], []>} : vector<16x16xf32>, vector<16x4xf32>, vector<16x4xf32> -> vector<16x4xf32>
    %9 = tpu.concatenate %6, %4, %8 in 1 : vector<16x4xf32>, vector<16x4xf32>, vector<16x4xf32> -> vector<16x12xf32>
    %c0_6 = arith.constant 0 : index
    %c0_7 = arith.constant 0 : index
    %10 = vector.load %arg1[%c0_6, %c0_7] : memref<408x128xf32, #tpu.memory_space<vmem>>, vector<12x4xf32>
    %cst_8 = arith.constant dense<0.000000e+00> : vector<16x4xf32>
    %11 = tpu.matmul %9, %10, %cst_8 {dimension_numbers = #tpu.dot_dimension_numbers<[1], [0], [0], [1], [0, 0, 1, 1], [], []>} : vector<16x12xf32>, vector<12x4xf32>, vector<16x4xf32> -> vector<16x4xf32>
    %c16 = arith.constant 16 : index
    %c0_9 = arith.constant 0 : index
    %12 = vector.load %arg1[%c16, %c0_9] : memref<408x128xf32, #tpu.memory_space<vmem>>, vector<1x4xf32>
    %13 = vector.broadcast %12 : vector<1x4xf32> to vector<16x4xf32>
    %14 = arith.addf %11, %13 : vector<16x4xf32>
    %15 = math.tanh %14 : vector<16x4xf32>
    %c208 = arith.constant 208 : index
    %c0_10 = arith.constant 0 : index
    %16 = vector.load %arg1[%c208, %c0_10] : memref<408x128xf32, #tpu.memory_space<vmem>>, vector<14x16xf32>
    %cst_11 = arith.constant dense<0.000000e+00> : vector<14x4xf32>
    %17 = tpu.matmul %16, %15, %cst_11 {dimension_numbers = #tpu.dot_dimension_numbers<[1], [0], [0], [1], [0, 0, 1, 1], [], []>} : vector<14x16xf32>, vector<16x4xf32>, vector<14x4xf32> -> vector<14x4xf32>
    %c224 = arith.constant 224 : index
    %c0_12 = arith.constant 0 : index
    %18 = vector.load %arg1[%c224, %c0_12] : memref<408x128xf32, #tpu.memory_space<vmem>>, vector<14x16xf32>
    %cst_13 = arith.constant dense<0.000000e+00> : vector<14x4xf32>
    %19 = tpu.matmul %18, %15, %cst_13 {dimension_numbers = #tpu.dot_dimension_numbers<[1], [0], [0], [1], [0, 0, 1, 1], [], []>} : vector<14x16xf32>, vector<16x4xf32>, vector<14x4xf32> -> vector<14x4xf32>
    %20 = arith.addf %17, %19 : vector<14x4xf32>
    %c256 = arith.constant 256 : index
    %c0_14 = arith.constant 0 : index
    %21 = vector.load %arg1[%c256, %c0_14] : memref<408x128xf32, #tpu.memory_space<vmem>>, vector<4x16xf32>
    %cst_15 = arith.constant dense<0.000000e+00> : vector<14x16xf32>
    %22 = tpu.matmul %17, %21, %cst_15 {dimension_numbers = #tpu.dot_dimension_numbers<[1], [0], [0], [1], [0, 0, 1, 1], [], []>} : vector<14x4xf32>, vector<4x16xf32>, vector<14x16xf32> -> vector<14x16xf32>
    %c264 = arith.constant 264 : index
    %c0_16 = arith.constant 0 : index
    %23 = vector.load %arg1[%c264, %c0_16] : memref<408x128xf32, #tpu.memory_space<vmem>>, vector<4x16xf32>
    %cst_17 = arith.constant dense<0.000000e+00> : vector<14x16xf32>
    %24 = tpu.matmul %19, %23, %cst_17 {dimension_numbers = #tpu.dot_dimension_numbers<[1], [0], [0], [1], [0, 0, 1, 1], [], []>} : vector<14x4xf32>, vector<4x16xf32>, vector<14x16xf32> -> vector<14x16xf32>
    %25 = arith.mulf %22, %24 : vector<14x16xf32>
    %c272 = arith.constant 272 : index
    %c0_18 = arith.constant 0 : index
    %26 = vector.load %arg1[%c272, %c0_18] : memref<408x128xf32, #tpu.memory_space<vmem>>, vector<16x6xf32>
    %cst_19 = arith.constant dense<0.000000e+00> : vector<14x6xf32>
    %27 = tpu.matmul %25, %26, %cst_19 {dimension_numbers = #tpu.dot_dimension_numbers<[1], [0], [0], [1], [0, 0, 1, 1], [], []>} : vector<14x16xf32>, vector<16x6xf32>, vector<14x6xf32> -> vector<14x6xf32>
    %c240 = arith.constant 240 : index
    %c0_20 = arith.constant 0 : index
    %28 = vector.load %arg1[%c240, %c0_20] : memref<408x128xf32, #tpu.memory_space<vmem>>, vector<14x14xf32>
    %cst_21 = arith.constant dense<0.000000e+00> : vector<14x6xf32>
    %29 = tpu.matmul %28, %27, %cst_21 {dimension_numbers = #tpu.dot_dimension_numbers<[1], [0], [0], [1], [0, 0, 1, 1], [], []>} : vector<14x14xf32>, vector<14x6xf32>, vector<14x6xf32> -> vector<14x6xf32>
    %30 = tpu.concatenate %20, %29 in 1 : vector<14x4xf32>, vector<14x6xf32> -> vector<14x10xf32>
    %c40 = arith.constant 40 : index
    %c0_22 = arith.constant 0 : index
    %31 = vector.load %arg1[%c40, %c0_22] : memref<408x128xf32, #tpu.memory_space<vmem>>, vector<8x32xf32>
    %c24 = arith.constant 24 : index
    %c0_23 = arith.constant 0 : index
    %32 = vector.load %arg1[%c24, %c0_23] : memref<408x128xf32, #tpu.memory_space<vmem>>, vector<10x32xf32>
    %cst_24 = arith.constant dense<0.000000e+00> : vector<14x32xf32>
    %33 = tpu.matmul %30, %32, %cst_24 {dimension_numbers = #tpu.dot_dimension_numbers<[1], [0], [0], [1], [0, 0, 1, 1], [], []>} : vector<14x10xf32>, vector<10x32xf32>, vector<14x32xf32> -> vector<14x32xf32>
    %c48 = arith.constant 48 : index
    %c0_25 = arith.constant 0 : index
    %34 = vector.load %arg1[%c48, %c0_25] : memref<408x128xf32, #tpu.memory_space<vmem>>, vector<1x32xf32>
    %35 = vector.broadcast %34 : vector<1x32xf32> to vector<14x32xf32>
    %36 = arith.addf %33, %35 : vector<14x32xf32>
    %cst_26 = arith.constant 0.000000e+00 : f32
    %37 = vector.broadcast %cst_26 : f32 to vector<2x8xf32>
    %cst_27 = arith.constant 0.000000e+00 : f32
    %38 = vector.broadcast %cst_27 : f32 to vector<2x8xf32>
    %39 = vector.extract_strided_slice %36 {offsets = [0, 0], sizes = [2, 32], strides = [1, 1]} : vector<14x32xf32> to vector<2x32xf32>
    %cst_28 = arith.constant dense<0.000000e+00> : vector<2x32xf32>
    %40 = tpu.matmul %37, %31, %cst_28 {dimension_numbers = #tpu.dot_dimension_numbers<[1], [0], [0], [1], [0, 0, 1, 1], [], []>} : vector<2x8xf32>, vector<8x32xf32>, vector<2x32xf32> -> vector<2x32xf32>
    %41 = arith.addf %39, %40 : vector<2x32xf32>
    %42 = vector.extract_strided_slice %41 {offsets = [0, 0], sizes = [2, 24], strides = [1, 1]} : vector<2x32xf32> to vector<2x24xf32>
    %43 = arith.negf %42 : vector<2x24xf32>
    %44 = math.exp %43 : vector<2x24xf32>
    %cst_29 = arith.constant 1.000000e+00 : f32
    %45 = vector.broadcast %cst_29 : f32 to vector<2x24xf32>
    %46 = arith.addf %45, %44 : vector<2x24xf32>
    %47 = arith.divf %45, %46 : vector<2x24xf32>
    %48 = vector.extract_strided_slice %41 {offsets = [0, 24], sizes = [2, 8], strides = [1, 1]} : vector<2x32xf32> to vector<2x8xf32>
    %49 = math.tanh %48 : vector<2x8xf32>
    %50 = vector.extract_strided_slice %47 {offsets = [0, 8], sizes = [2, 8], strides = [1, 1]} : vector<2x24xf32> to vector<2x8xf32>
    %51 = arith.mulf %50, %38 : vector<2x8xf32>
    %52 = vector.extract_strided_slice %47 {offsets = [0, 0], sizes = [2, 8], strides = [1, 1]} : vector<2x24xf32> to vector<2x8xf32>
    %53 = arith.mulf %52, %49 : vector<2x8xf32>
    %54 = arith.addf %51, %53 : vector<2x8xf32>
    %55 = vector.extract_strided_slice %47 {offsets = [0, 16], sizes = [2, 8], strides = [1, 1]} : vector<2x24xf32> to vector<2x8xf32>
    %56 = math.tanh %54 : vector<2x8xf32>
    %57 = arith.mulf %55, %56 : vector<2x8xf32>
    %58 = vector.extract_strided_slice %36 {offsets = [2, 0], sizes = [2, 32], strides = [1, 1]} : vector<14x32xf32> to vector<2x32xf32>
    %cst_30 = arith.constant dense<0.000000e+00> : vector<2x32xf32>
    %59 = tpu.matmul %57, %31, %cst_30 {dimension_numbers = #tpu.dot_dimension_numbers<[1], [0], [0], [1], [0, 0, 1, 1], [], []>} : vector<2x8xf32>, vector<8x32xf32>, vector<2x32xf32> -> vector<2x32xf32>
    %60 = arith.addf %58, %59 : vector<2x32xf32>
    %61 = vector.extract_strided_slice %60 {offsets = [0, 0], sizes = [2, 24], strides = [1, 1]} : vector<2x32xf32> to vector<2x24xf32>
    %62 = arith.negf %61 : vector<2x24xf32>
    %63 = math.exp %62 : vector<2x24xf32>
    %cst_31 = arith.constant 1.000000e+00 : f32
    %64 = vector.broadcast %cst_31 : f32 to vector<2x24xf32>
    %65 = arith.addf %64, %63 : vector<2x24xf32>
    %66 = arith.divf %64, %65 : vector<2x24xf32>
    %67 = vector.extract_strided_slice %60 {offsets = [0, 24], sizes = [2, 8], strides = [1, 1]} : vector<2x32xf32> to vector<2x8xf32>
    %68 = math.tanh %67 : vector<2x8xf32>
    %69 = vector.extract_strided_slice %66 {offsets = [0, 8], sizes = [2, 8], strides = [1, 1]} : vector<2x24xf32> to vector<2x8xf32>
    %70 = arith.mulf %69, %54 : vector<2x8xf32>
    %71 = vector.extract_strided_slice %66 {offsets = [0, 0], sizes = [2, 8], strides = [1, 1]} : vector<2x24xf32> to vector<2x8xf32>
    %72 = arith.mulf %71, %68 : vector<2x8xf32>
    %73 = arith.addf %70, %72 : vector<2x8xf32>
    %74 = vector.extract_strided_slice %66 {offsets = [0, 16], sizes = [2, 8], strides = [1, 1]} : vector<2x24xf32> to vector<2x8xf32>
    %75 = math.tanh %73 : vector<2x8xf32>
    %76 = arith.mulf %74, %75 : vector<2x8xf32>
    %77 = vector.extract_strided_slice %36 {offsets = [4, 0], sizes = [2, 32], strides = [1, 1]} : vector<14x32xf32> to vector<2x32xf32>
    %cst_32 = arith.constant dense<0.000000e+00> : vector<2x32xf32>
    %78 = tpu.matmul %76, %31, %cst_32 {dimension_numbers = #tpu.dot_dimension_numbers<[1], [0], [0], [1], [0, 0, 1, 1], [], []>} : vector<2x8xf32>, vector<8x32xf32>, vector<2x32xf32> -> vector<2x32xf32>
    %79 = arith.addf %77, %78 : vector<2x32xf32>
    %80 = vector.extract_strided_slice %79 {offsets = [0, 0], sizes = [2, 24], strides = [1, 1]} : vector<2x32xf32> to vector<2x24xf32>
    %81 = arith.negf %80 : vector<2x24xf32>
    %82 = math.exp %81 : vector<2x24xf32>
    %cst_33 = arith.constant 1.000000e+00 : f32
    %83 = vector.broadcast %cst_33 : f32 to vector<2x24xf32>
    %84 = arith.addf %83, %82 : vector<2x24xf32>
    %85 = arith.divf %83, %84 : vector<2x24xf32>
    %86 = vector.extract_strided_slice %79 {offsets = [0, 24], sizes = [2, 8], strides = [1, 1]} : vector<2x32xf32> to vector<2x8xf32>
    %87 = math.tanh %86 : vector<2x8xf32>
    %88 = vector.extract_strided_slice %85 {offsets = [0, 8], sizes = [2, 8], strides = [1, 1]} : vector<2x24xf32> to vector<2x8xf32>
    %89 = arith.mulf %88, %73 : vector<2x8xf32>
    %90 = vector.extract_strided_slice %85 {offsets = [0, 0], sizes = [2, 8], strides = [1, 1]} : vector<2x24xf32> to vector<2x8xf32>
    %91 = arith.mulf %90, %87 : vector<2x8xf32>
    %92 = arith.addf %89, %91 : vector<2x8xf32>
    %93 = vector.extract_strided_slice %85 {offsets = [0, 16], sizes = [2, 8], strides = [1, 1]} : vector<2x24xf32> to vector<2x8xf32>
    %94 = math.tanh %92 : vector<2x8xf32>
    %95 = arith.mulf %93, %94 : vector<2x8xf32>
    %96 = vector.extract_strided_slice %36 {offsets = [6, 0], sizes = [2, 32], strides = [1, 1]} : vector<14x32xf32> to vector<2x32xf32>
    %cst_34 = arith.constant dense<0.000000e+00> : vector<2x32xf32>
    %97 = tpu.matmul %95, %31, %cst_34 {dimension_numbers = #tpu.dot_dimension_numbers<[1], [0], [0], [1], [0, 0, 1, 1], [], []>} : vector<2x8xf32>, vector<8x32xf32>, vector<2x32xf32> -> vector<2x32xf32>
    %98 = arith.addf %96, %97 : vector<2x32xf32>
    %99 = vector.extract_strided_slice %98 {offsets = [0, 0], sizes = [2, 24], strides = [1, 1]} : vector<2x32xf32> to vector<2x24xf32>
    %100 = arith.negf %99 : vector<2x24xf32>
    %101 = math.exp %100 : vector<2x24xf32>
    %cst_35 = arith.constant 1.000000e+00 : f32
    %102 = vector.broadcast %cst_35 : f32 to vector<2x24xf32>
    %103 = arith.addf %102, %101 : vector<2x24xf32>
    %104 = arith.divf %102, %103 : vector<2x24xf32>
    %105 = vector.extract_strided_slice %98 {offsets = [0, 24], sizes = [2, 8], strides = [1, 1]} : vector<2x32xf32> to vector<2x8xf32>
    %106 = math.tanh %105 : vector<2x8xf32>
    %107 = vector.extract_strided_slice %104 {offsets = [0, 8], sizes = [2, 8], strides = [1, 1]} : vector<2x24xf32> to vector<2x8xf32>
    %108 = arith.mulf %107, %92 : vector<2x8xf32>
    %109 = vector.extract_strided_slice %104 {offsets = [0, 0], sizes = [2, 8], strides = [1, 1]} : vector<2x24xf32> to vector<2x8xf32>
    %110 = arith.mulf %109, %106 : vector<2x8xf32>
    %111 = arith.addf %108, %110 : vector<2x8xf32>
    %112 = vector.extract_strided_slice %104 {offsets = [0, 16], sizes = [2, 8], strides = [1, 1]} : vector<2x24xf32> to vector<2x8xf32>
    %113 = math.tanh %111 : vector<2x8xf32>
    %114 = arith.mulf %112, %113 : vector<2x8xf32>
    %115 = vector.extract_strided_slice %36 {offsets = [8, 0], sizes = [2, 32], strides = [1, 1]} : vector<14x32xf32> to vector<2x32xf32>
    %cst_36 = arith.constant dense<0.000000e+00> : vector<2x32xf32>
    %116 = tpu.matmul %114, %31, %cst_36 {dimension_numbers = #tpu.dot_dimension_numbers<[1], [0], [0], [1], [0, 0, 1, 1], [], []>} : vector<2x8xf32>, vector<8x32xf32>, vector<2x32xf32> -> vector<2x32xf32>
    %117 = arith.addf %115, %116 : vector<2x32xf32>
    %118 = vector.extract_strided_slice %117 {offsets = [0, 0], sizes = [2, 24], strides = [1, 1]} : vector<2x32xf32> to vector<2x24xf32>
    %119 = arith.negf %118 : vector<2x24xf32>
    %120 = math.exp %119 : vector<2x24xf32>
    %cst_37 = arith.constant 1.000000e+00 : f32
    %121 = vector.broadcast %cst_37 : f32 to vector<2x24xf32>
    %122 = arith.addf %121, %120 : vector<2x24xf32>
    %123 = arith.divf %121, %122 : vector<2x24xf32>
    %124 = vector.extract_strided_slice %117 {offsets = [0, 24], sizes = [2, 8], strides = [1, 1]} : vector<2x32xf32> to vector<2x8xf32>
    %125 = math.tanh %124 : vector<2x8xf32>
    %126 = vector.extract_strided_slice %123 {offsets = [0, 8], sizes = [2, 8], strides = [1, 1]} : vector<2x24xf32> to vector<2x8xf32>
    %127 = arith.mulf %126, %111 : vector<2x8xf32>
    %128 = vector.extract_strided_slice %123 {offsets = [0, 0], sizes = [2, 8], strides = [1, 1]} : vector<2x24xf32> to vector<2x8xf32>
    %129 = arith.mulf %128, %125 : vector<2x8xf32>
    %130 = arith.addf %127, %129 : vector<2x8xf32>
    %131 = vector.extract_strided_slice %123 {offsets = [0, 16], sizes = [2, 8], strides = [1, 1]} : vector<2x24xf32> to vector<2x8xf32>
    %132 = math.tanh %130 : vector<2x8xf32>
    %133 = arith.mulf %131, %132 : vector<2x8xf32>
    %134 = vector.extract_strided_slice %36 {offsets = [10, 0], sizes = [2, 32], strides = [1, 1]} : vector<14x32xf32> to vector<2x32xf32>
    %cst_38 = arith.constant dense<0.000000e+00> : vector<2x32xf32>
    %135 = tpu.matmul %133, %31, %cst_38 {dimension_numbers = #tpu.dot_dimension_numbers<[1], [0], [0], [1], [0, 0, 1, 1], [], []>} : vector<2x8xf32>, vector<8x32xf32>, vector<2x32xf32> -> vector<2x32xf32>
    %136 = arith.addf %134, %135 : vector<2x32xf32>
    %137 = vector.extract_strided_slice %136 {offsets = [0, 0], sizes = [2, 24], strides = [1, 1]} : vector<2x32xf32> to vector<2x24xf32>
    %138 = arith.negf %137 : vector<2x24xf32>
    %139 = math.exp %138 : vector<2x24xf32>
    %cst_39 = arith.constant 1.000000e+00 : f32
    %140 = vector.broadcast %cst_39 : f32 to vector<2x24xf32>
    %141 = arith.addf %140, %139 : vector<2x24xf32>
    %142 = arith.divf %140, %141 : vector<2x24xf32>
    %143 = vector.extract_strided_slice %136 {offsets = [0, 24], sizes = [2, 8], strides = [1, 1]} : vector<2x32xf32> to vector<2x8xf32>
    %144 = math.tanh %143 : vector<2x8xf32>
    %145 = vector.extract_strided_slice %142 {offsets = [0, 8], sizes = [2, 8], strides = [1, 1]} : vector<2x24xf32> to vector<2x8xf32>
    %146 = arith.mulf %145, %130 : vector<2x8xf32>
    %147 = vector.extract_strided_slice %142 {offsets = [0, 0], sizes = [2, 8], strides = [1, 1]} : vector<2x24xf32> to vector<2x8xf32>
    %148 = arith.mulf %147, %144 : vector<2x8xf32>
    %149 = arith.addf %146, %148 : vector<2x8xf32>
    %150 = vector.extract_strided_slice %142 {offsets = [0, 16], sizes = [2, 8], strides = [1, 1]} : vector<2x24xf32> to vector<2x8xf32>
    %151 = math.tanh %149 : vector<2x8xf32>
    %152 = arith.mulf %150, %151 : vector<2x8xf32>
    %153 = vector.extract_strided_slice %36 {offsets = [12, 0], sizes = [2, 32], strides = [1, 1]} : vector<14x32xf32> to vector<2x32xf32>
    %cst_40 = arith.constant dense<0.000000e+00> : vector<2x32xf32>
    %154 = tpu.matmul %152, %31, %cst_40 {dimension_numbers = #tpu.dot_dimension_numbers<[1], [0], [0], [1], [0, 0, 1, 1], [], []>} : vector<2x8xf32>, vector<8x32xf32>, vector<2x32xf32> -> vector<2x32xf32>
    %155 = arith.addf %153, %154 : vector<2x32xf32>
    %156 = vector.extract_strided_slice %155 {offsets = [0, 0], sizes = [2, 24], strides = [1, 1]} : vector<2x32xf32> to vector<2x24xf32>
    %157 = arith.negf %156 : vector<2x24xf32>
    %158 = math.exp %157 : vector<2x24xf32>
    %cst_41 = arith.constant 1.000000e+00 : f32
    %159 = vector.broadcast %cst_41 : f32 to vector<2x24xf32>
    %160 = arith.addf %159, %158 : vector<2x24xf32>
    %161 = arith.divf %159, %160 : vector<2x24xf32>
    %162 = vector.extract_strided_slice %155 {offsets = [0, 24], sizes = [2, 8], strides = [1, 1]} : vector<2x32xf32> to vector<2x8xf32>
    %163 = math.tanh %162 : vector<2x8xf32>
    %164 = vector.extract_strided_slice %161 {offsets = [0, 8], sizes = [2, 8], strides = [1, 1]} : vector<2x24xf32> to vector<2x8xf32>
    %165 = arith.mulf %164, %149 : vector<2x8xf32>
    %166 = vector.extract_strided_slice %161 {offsets = [0, 0], sizes = [2, 8], strides = [1, 1]} : vector<2x24xf32> to vector<2x8xf32>
    %167 = arith.mulf %166, %163 : vector<2x8xf32>
    %168 = arith.addf %165, %167 : vector<2x8xf32>
    %169 = vector.extract_strided_slice %161 {offsets = [0, 16], sizes = [2, 8], strides = [1, 1]} : vector<2x24xf32> to vector<2x8xf32>
    %170 = math.tanh %168 : vector<2x8xf32>
    %171 = arith.mulf %169, %170 : vector<2x8xf32>
    %172 = tpu.concatenate %57, %76, %95, %114, %133, %152, %171 in 0 : vector<2x8xf32>, vector<2x8xf32>, vector<2x8xf32>, vector<2x8xf32>, vector<2x8xf32>, vector<2x8xf32>, vector<2x8xf32> -> vector<14x8xf32>
    %c368 = arith.constant 368 : index
    %c0_42 = arith.constant 0 : index
    %173 = vector.load %arg1[%c368, %c0_42] : memref<408x128xf32, #tpu.memory_space<vmem>>, vector<12x14xf32>
    %cst_43 = arith.constant dense<0.000000e+00> : vector<12x8xf32>
    %174 = tpu.matmul %173, %172, %cst_43 {dimension_numbers = #tpu.dot_dimension_numbers<[1], [0], [0], [1], [0, 0, 1, 1], [], []>} : vector<12x14xf32>, vector<14x8xf32>, vector<12x8xf32> -> vector<12x8xf32>
    %c384 = arith.constant 384 : index
    %c0_44 = arith.constant 0 : index
    %175 = vector.load %arg1[%c384, %c0_44] : memref<408x128xf32, #tpu.memory_space<vmem>>, vector<12x14xf32>
    %cst_45 = arith.constant dense<0.000000e+00> : vector<12x8xf32>
    %176 = tpu.matmul %175, %172, %cst_45 {dimension_numbers = #tpu.dot_dimension_numbers<[1], [0], [0], [1], [0, 0, 1, 1], [], []>} : vector<12x14xf32>, vector<14x8xf32>, vector<12x8xf32> -> vector<12x8xf32>
    %c288 = arith.constant 288 : index
    %c0_46 = arith.constant 0 : index
    %177 = vector.load %arg1[%c288, %c0_46] : memref<408x128xf32, #tpu.memory_space<vmem>>, vector<8x64xf32>
    %cst_47 = arith.constant dense<0.000000e+00> : vector<12x64xf32>
    %178 = tpu.matmul %174, %177, %cst_47 {dimension_numbers = #tpu.dot_dimension_numbers<[1], [0], [0], [1], [0, 0, 1, 1], [], []>} : vector<12x8xf32>, vector<8x64xf32>, vector<12x64xf32> -> vector<12x64xf32>
    %c296 = arith.constant 296 : index
    %c0_48 = arith.constant 0 : index
    %179 = vector.load %arg1[%c296, %c0_48] : memref<408x128xf32, #tpu.memory_space<vmem>>, vector<8x64xf32>
    %cst_49 = arith.constant dense<0.000000e+00> : vector<12x64xf32>
    %180 = tpu.matmul %176, %179, %cst_49 {dimension_numbers = #tpu.dot_dimension_numbers<[1], [0], [0], [1], [0, 0, 1, 1], [], []>} : vector<12x8xf32>, vector<8x64xf32>, vector<12x64xf32> -> vector<12x64xf32>
    %181 = arith.mulf %178, %180 : vector<12x64xf32>
    %c400 = arith.constant 400 : index
    %c0_50 = arith.constant 0 : index
    %182 = vector.load %arg1[%c400, %c0_50] : memref<408x128xf32, #tpu.memory_space<vmem>>, vector<2x12xf32>
    %c304 = arith.constant 304 : index
    %c0_51 = arith.constant 0 : index
    %183 = vector.load %arg1[%c304, %c0_51] : memref<408x128xf32, #tpu.memory_space<vmem>>, vector<64x28xf32>
    %cst_52 = arith.constant dense<0.000000e+00> : vector<12x28xf32>
    %184 = tpu.matmul %181, %183, %cst_52 {dimension_numbers = #tpu.dot_dimension_numbers<[1], [0], [0], [1], [0, 0, 1, 1], [], []>} : vector<12x64xf32>, vector<64x28xf32>, vector<12x28xf32> -> vector<12x28xf32>
    %cst_53 = arith.constant dense<0.000000e+00> : vector<2x28xf32>
    %185 = tpu.matmul %182, %184, %cst_53 {dimension_numbers = #tpu.dot_dimension_numbers<[1], [0], [0], [1], [0, 0, 1, 1], [], []>} : vector<2x12xf32>, vector<12x28xf32>, vector<2x28xf32> -> vector<2x28xf32>
    %186 = arith.subf %171, %57 : vector<2x8xf32>
    %187 = tpu.concatenate %186, %185 in 1 : vector<2x8xf32>, vector<2x28xf32> -> vector<2x36xf32>
    %188 = tpu.concatenate %187, %2 in 1 : vector<2x36xf32>, vector<2x3xf32> -> vector<2x39xf32>
    %c56 = arith.constant 56 : index
    %c0_54 = arith.constant 0 : index
    %189 = vector.load %arg1[%c56, %c0_54] : memref<408x128xf32, #tpu.memory_space<vmem>>, vector<39x6xf32>
    %cst_55 = arith.constant dense<0.000000e+00> : vector<2x6xf32>
    %190 = tpu.matmul %188, %189, %cst_55 {dimension_numbers = #tpu.dot_dimension_numbers<[1], [0], [0], [1], [0, 0, 1, 1], [], []>} : vector<2x39xf32>, vector<39x6xf32>, vector<2x6xf32> -> vector<2x6xf32>
    %c96 = arith.constant 96 : index
    %c0_56 = arith.constant 0 : index
    %191 = vector.load %arg1[%c96, %c0_56] : memref<408x128xf32, #tpu.memory_space<vmem>>, vector<1x6xf32>
    %192 = vector.broadcast %191 : vector<1x6xf32> to vector<2x6xf32>
    %193 = arith.addf %190, %192 : vector<2x6xf32>
    %194 = math.tanh %193 : vector<2x6xf32>
    %c104 = arith.constant 104 : index
    %c0_57 = arith.constant 0 : index
    %195 = vector.load %arg1[%c104, %c0_57] : memref<408x128xf32, #tpu.memory_space<vmem>>, vector<1x6xf32>
    %196 = vector.broadcast %195 : vector<1x6xf32> to vector<2x6xf32>
    %197 = arith.mulf %194, %196 : vector<2x6xf32>
    %c112 = arith.constant 112 : index
    %c0_58 = arith.constant 0 : index
    %198 = vector.load %arg1[%c112, %c0_58] : memref<408x128xf32, #tpu.memory_space<vmem>>, vector<6x16xf32>
    %cst_59 = arith.constant dense<0.000000e+00> : vector<2x16xf32>
    %199 = tpu.matmul %197, %198, %cst_59 {dimension_numbers = #tpu.dot_dimension_numbers<[1], [0], [0], [1], [0, 0, 1, 1], [], []>} : vector<2x6xf32>, vector<6x16xf32>, vector<2x16xf32> -> vector<2x16xf32>
    %c120 = arith.constant 120 : index
    %c0_60 = arith.constant 0 : index
    %200 = vector.load %arg1[%c120, %c0_60] : memref<408x128xf32, #tpu.memory_space<vmem>>, vector<1x16xf32>
    %201 = vector.broadcast %200 : vector<1x16xf32> to vector<2x16xf32>
    %202 = arith.addf %199, %201 : vector<2x16xf32>
    %cst_61 = arith.constant 0.000000e+00 : f32
    %203 = vector.broadcast %cst_61 : f32 to vector<2x16xf32>
    %204 = arith.maximumf %202, %203 : vector<2x16xf32>
    %c128 = arith.constant 128 : index
    %c0_62 = arith.constant 0 : index
    %205 = vector.load %arg1[%c128, %c0_62] : memref<408x128xf32, #tpu.memory_space<vmem>>, vector<16x16xf32>
    %cst_63 = arith.constant dense<0.000000e+00> : vector<2x16xf32>
    %206 = tpu.matmul %204, %205, %cst_63 {dimension_numbers = #tpu.dot_dimension_numbers<[1], [0], [0], [1], [0, 0, 1, 1], [], []>} : vector<2x16xf32>, vector<16x16xf32>, vector<2x16xf32> -> vector<2x16xf32>
    %c144 = arith.constant 144 : index
    %c0_64 = arith.constant 0 : index
    %207 = vector.load %arg1[%c144, %c0_64] : memref<408x128xf32, #tpu.memory_space<vmem>>, vector<1x16xf32>
    %208 = vector.broadcast %207 : vector<1x16xf32> to vector<2x16xf32>
    %209 = arith.addf %206, %208 : vector<2x16xf32>
    %cst_65 = arith.constant 0.000000e+00 : f32
    %210 = vector.broadcast %cst_65 : f32 to vector<2x16xf32>
    %211 = arith.maximumf %209, %210 : vector<2x16xf32>
    %c152 = arith.constant 152 : index
    %c0_66 = arith.constant 0 : index
    %212 = vector.load %arg1[%c152, %c0_66] : memref<408x128xf32, #tpu.memory_space<vmem>>, vector<16x3xf32>
    %cst_67 = arith.constant dense<0.000000e+00> : vector<2x3xf32>
    %213 = tpu.matmul %211, %212, %cst_67 {dimension_numbers = #tpu.dot_dimension_numbers<[1], [0], [0], [1], [0, 0, 1, 1], [], []>} : vector<2x16xf32>, vector<16x3xf32>, vector<2x3xf32> -> vector<2x3xf32>
    %c168 = arith.constant 168 : index
    %c0_68 = arith.constant 0 : index
    %214 = vector.load %arg1[%c168, %c0_68] : memref<408x128xf32, #tpu.memory_space<vmem>>, vector<1x3xf32>
    %215 = vector.broadcast %214 : vector<1x3xf32> to vector<2x3xf32>
    %216 = arith.addf %213, %215 : vector<2x3xf32>
    %c0_69 = arith.constant 0 : index
    %c0_70 = arith.constant 0 : index
    %217 = vector.load %arg2[%c0_69, %c0_70] : memref<2x3xf32, #tpu.memory_space<vmem>>, vector<2x3xf32>
    tpu.vector_store %arg2[%c0_69, %c0_70], %216 {strides = array<i32>} : memref<2x3xf32, #tpu.memory_space<vmem>>, vector<2x3xf32>,
    return
  }
}

</mosaic_0001>

<llo_original>
// kernel: stacked_deepsignet_forward.1
$region0: #{stacked_deepsignet_forward.1}
  #allocation0 [shape = 'u32[]', space=smem, size = 0x4, offset = 0x4, fixed_abs, tag = 'smem constant byte address 0x4 - core index']
  #allocation1 [shape = 'u32[144,128]{1,0:T(1,128)}', space=vmem, size = 0x12000, scoped, tag = 'internal scratch']
  %s0 = inlined_call_operand.vmem [shape: f32[2,8,7], index: 0, kind: input, shape index: {}]
  %s1 = inlined_call_operand.hbm [shape: f32[408,128], index: 1, kind: input, shape index: {}]
  %s2 = inlined_call_operand.hbm [shape: f32[2,3], index: 2, kind: output, shape index: {}]
  %s3 = sld [smem:[#allocation0]]
  $region22: #{stacked_deepsignet_forward.1} parent=0
    _
  %s5 = ssub.s32 1, %s3
  %s6 = scalar_select 0, %s5, %s3
  $region1: #{stacked_deepsignet_forward.1} parent=0
    #allocation2 [shape = 'u8[208896]{0}', space=vmem, size = 0x33000, scoped, tag = 'input window, operand 1, single buffered']
    #allocation3 [shape = 's32[1]{0}', space=sflag, size = 0x4, scoped, tag = 'scoped memory for stacked_deepsignet_forward.1']
    #allocation4 [shape = 's32[1]{0}', space=sflag, size = 0x4, scoped, tag = 'scoped memory for stacked_deepsignet_forward.1']
    #allocation5 [shape = 'u8[1024]{0}', space=vmem, size = 0x400, scoped, tag = 'output window, operand 0, single buffered']
    %7 = vsyncpa [#allocation3], 0
    %8 = vsyncpa [#allocation4], 0
    // Predicated region
    $region2: #{stacked_deepsignet_forward.1} parent=1 // pred_check
      _
    $region3: #{stacked_deepsignet_forward.1} parent=1 // pred_check_branch
      %10 = sbr.rel (0) target = $region5
    $region4: #{stacked_deepsignet_forward.1} parent=1 // pred_region
      _
    $region5: #{stacked_deepsignet_forward.1} parent=1 // pred_fallthru
      _
    // Predicated region
    $region6: #{stacked_deepsignet_forward.1} parent=1 // pred_check
      _
    $region7: #{stacked_deepsignet_forward.1} parent=1 // pred_check_branch
      %12 = sbr.rel (0) target = $region9
    $region8: #{stacked_deepsignet_forward.1} parent=1 // pred_region
      %s14 = ssub.s32 6528, 6528
      %15 = vsyncadd [#allocation3], %s14
      %s16 = sshll.u32 [#allocation2], 4
      %s17 = int_to_ptr.vmem [resolvable:$true] %s16
      %22 = dma.hbm_to_vmem [thread:$0]  %s1, 6528, %s17, [#allocation3], 128, 128, 8
    $region9: #{stacked_deepsignet_forward.1} parent=1 // pred_fallthru
      _
    // Predicated region
    $region10: #{stacked_deepsignet_forward.1} parent=1 // pred_check
      _
    $region11: #{stacked_deepsignet_forward.1} parent=1 // pred_check_branch
      %24 = sbr.rel (0) target = $region13
    $region12: #{stacked_deepsignet_forward.1} parent=1 // pred_region
      %25 = dma.done [#allocation3], 6528
    $region13: #{stacked_deepsignet_forward.1} parent=1 // pred_fallthru
      _
    %v26 = vld [vmem:[%s0] sm:$0xff]
    %v27 = vld [vmem:[%s0 + $0x8] sm:$0xff]
    %vm28 = vcmask 56352
    %v29 = vsel %vm28, %v26, -inf
    %v30 = vrot.slane %v29, 4
    %v31 = vmax.f32 %v29, %v30
    %v32 = vrot.slane %v31, 2
    %v33 = vmax.f32 %v31, %v32
    %v34 = vrot.slane %v33, 1
    %v35 = vmax.f32 %v33, %v34
    %v36 = vsel %vm28, %v27, -inf
    %v37 = vrot.slane %v36, 4
    %v38 = vmax.f32 %v36, %v37
    %v39 = vrot.slane %v38, 2
    %v40 = vmax.f32 %v38, %v39
    %v41 = vrot.slane %v40, 1
    %v42 = vmax.f32 %v40, %v41
    %v43 = vld [vmem:[#allocation2 + $0xb0] sm:$0xff]
    %v44 = vld [vmem:[#allocation2 + $0xb8] sm:$0xff]
    %vm45 = vcmask 130048
    %v47 = vsel %vm45, %v43, 0
    %v50 = vsel %vm45, %v44, 0
    %52 = vmatprep.subr.mxu0 0.0
    %53 = vmatpush1.msra.mxu0 %v26
    %54 = vmatprep.subr.mxu0 0.0
    %55 = vmatpush1.msra.mxu0 %v27
    %56 = vmatprep.subr.mxu0 0.0
    %57 = vmatpush1.msra.mxu0 0.0
    %58 = vmatprep.subr.mxu0 0.0
    %59 = vmatpush1.msra.mxu0 0.0
    %60 = vmatprep.subr.mxu0 0.0
    %61 = vmatpush1.msra.mxu0 0.0
    %62 = vmatprep.subr.mxu0 0.0
    %63 = vmatpush1.msra.mxu0 0.0
    %64 = vmatprep.subr.mxu0 0.0
    %65 = vmatpush1.msra.mxu0 0.0
    %66 = vmatprep.subr.mxu0 0.0
    %67 = vmatpush1.msra.mxu0 0.0
    %68 = vmatprep.subr.mxu0 0.0
    %69 = vmatpush1.msra.mxu0 0.0
    %70 = vmatprep.subr.mxu0 0.0
    %71 = vmatpush1.msra.mxu0 0.0
    %72 = vmatprep.subr.mxu0 0.0
    %73 = vmatpush1.msra.mxu0 0.0
    %74 = vmatprep.subr.mxu0 0.0
    %75 = vmatpush1.msra.mxu0 0.0
    %76 = vmatprep.subr.mxu0 0.0
    %77 = vmatpush1.msra.mxu0 0.0
    %78 = vmatprep.subr.mxu0 0.0
    %79 = vmatpush1.msra.mxu0 0.0
    %80 = vmatprep.subr.mxu0 0.0
    %81 = vmatpush1.msra.mxu0 0.0
    %82 = vmatprep.subr.mxu0 0.0
    %83 = vmatpush1.msra.mxu0 0.0
    %84 = vmatprep.subr.mxu0 0.0
    %85 = vmatpush1.msra.mxu0 0.0
    %86 = vmatprep.subr.mxu0 0.0
    %87 = vmatpush1.msra.mxu0 0.0
    %88 = vmatprep.subr.mxu0 0.0
    %89 = vmatpush1.msra.mxu0 0.0
    %90 = vmatprep.subr.mxu0 0.0
    %91 = vmatpush1.msra.mxu0 0.0
    %92 = vmatprep.subr.mxu0 0.0
    %93 = vmatpush1.msra.mxu0 0.0
    %94 = vmatprep.subr.mxu0 0.0
    %95 = vmatpush1.msra.mxu0 0.0
    %96 = vmatprep.subr.mxu0 0.0
    %97 = vmatpush1.msra.mxu0 0.0
    %98 = vmatprep.subr.mxu0 0.0
    %99 = vmatpush1.msra.mxu0 0.0
    %100 = vmatprep.subr.mxu0 0.0
    %101 = vmatpush1.msra.mxu0 0.0
    %102 = vmatprep.subr.mxu0 0.0
    %103 = vmatpush1.msra.mxu0 0.0
    %104 = vmatprep.subr.mxu0 0.0
    %105 = vmatpush1.msra.mxu0 0.0
    %106 = vmatprep.subr.mxu0 0.0
    %107 = vmatpush1.msra.mxu0 0.0
    %108 = vmatprep.subr.mxu0 0.0
    %109 = vmatpush1.msra.mxu0 0.0
    %110 = vmatprep.subr.mxu0 0.0
    %111 = vmatpush1.msra.mxu0 0.0
    %112 = vmatprep.subr.mxu0 0.0
    %113 = vmatpush1.msra.mxu0 0.0
    %114 = vmatprep.subr.mxu0 0.0
    %115 = vmatpush1.msra.mxu0 0.0
    %116 = vmatprep.mubr.f32.mxu0 0.0
    %117 = vmatmul.mubr.f32.gmra.mrb[0].mxu0 %v47
    %v118 = vpop.f32.mrb[0].mxu0
    %v119 = vadd.f32 0.0, %v118
    %v120 = vpop.f32.mrb[0].mxu0
    %121 = vmatprep.mubr.f32.mxu0 0.0
    %122 = vmatmul.mubr.f32.gmra.mrb[0].mxu0 %v50
    %v123 = vpop.f32.mrb[0].mxu0
    %v124 = vadd.f32 0.0, %v123
    %v125 = vpop.f32.mrb[0].mxu0
    %126 = vdwg.mxu0
    %v127 = vld [vmem:[#allocation2 + $0xc0] sm:$0xff]
    %v128 = vld [vmem:[#allocation2 + $0xc8] sm:$0xff]
    %v130 = vsel %vm45, %v127, 0
    %v133 = vsel %vm45, %v128, 0
    %135 = vmatprep.subr.mxu0 0.0
    %136 = vmatpush1.msra.mxu0 %v26
    %137 = vmatprep.subr.mxu0 0.0
    %138 = vmatpush1.msra.mxu0 %v27
    %139 = vmatprep.subr.mxu0 0.0
    %140 = vmatpush1.msra.mxu0 0.0
    %141 = vmatprep.subr.mxu0 0.0
    %142 = vmatpush1.msra.mxu0 0.0
    %143 = vmatprep.subr.mxu0 0.0
    %144 = vmatpush1.msra.mxu0 0.0
    %145 = vmatprep.subr.mxu0 0.0
    %146 = vmatpush1.msra.mxu0 0.0
    %147 = vmatprep.subr.mxu0 0.0
    %148 = vmatpush1.msra.mxu0 0.0
    %149 = vmatprep.subr.mxu0 0.0
    %150 = vmatpush1.msra.mxu0 0.0
    %151 = vmatprep.subr.mxu0 0.0
    %152 = vmatpush1.msra.mxu0 0.0
    %153 = vmatprep.subr.mxu0 0.0
    %154 = vmatpush1.msra.mxu0 0.0
    %155 = vmatprep.subr.mxu0 0.0
    %156 = vmatpush1.msra.mxu0 0.0
    %157 = vmatprep.subr.mxu0 0.0
    %158 = vmatpush1.msra.mxu0 0.0
    %159 = vmatprep.subr.mxu0 0.0
    %160 = vmatpush1.msra.mxu0 0.0
    %161 = vmatprep.subr.mxu0 0.0
    %162 = vmatpush1.msra.mxu0 0.0
    %163 = vmatprep.subr.mxu0 0.0
    %164 = vmatpush1.msra.mxu0 0.0
    %165 = vmatprep.subr.mxu0 0.0
    %166 = vmatpush1.msra.mxu0 0.0
    %167 = vmatprep.subr.mxu0 0.0
    %168 = vmatpush1.msra.mxu0 0.0
    %169 = vmatprep.subr.mxu0 0.0
    %170 = vmatpush1.msra.mxu0 0.0
    %171 = vmatprep.subr.mxu0 0.0
    %172 = vmatpush1.msra.mxu0 0.0
    %173 = vmatprep.subr.mxu0 0.0
    %174 = vmatpush1.msra.mxu0 0.0
    %175 = vmatprep.subr.mxu0 0.0
    %176 = vmatpush1.msra.mxu0 0.0
    %177 = vmatprep.subr.mxu0 0.0
    %178 = vmatpush1.msra.mxu0 0.0
    %179 = vmatprep.subr.mxu0 0.0
    %180 = vmatpush1.msra.mxu0 0.0
    %181 = vmatprep.subr.mxu0 0.0
    %182 = vmatpush1.msra.mxu0 0.0
    %183 = vmatprep.subr.mxu0 0.0
    %184 = vmatpush1.msra.mxu0 0.0
    %185 = vmatprep.subr.mxu0 0.0
    %186 = vmatpush1.msra.mxu0 0.0
    %187 = vmatprep.subr.mxu0 0.0
    %188 = vmatpush1.msra.mxu0 0.0
    %189 = vmatprep.subr.mxu0 0.0
    %190 = vmatpush1.msra.mxu0 0.0
    %191 = vmatprep.subr.mxu0 0.0
    %192 = vmatpush1.msra.mxu0 0.0
    %193 = vmatprep.subr.mxu0 0.0
    %194 = vmatpush1.msra.mxu0 0.0
    %195 = vmatprep.subr.mxu0 0.0
    %196 = vmatpush1.msra.mxu0 0.0
    %197 = vmatprep.subr.mxu0 0.0
    %198 = vmatpush1.msra.mxu0 0.0
    %199 = vmatprep.mubr.f32.mxu0 0.0
    %200 = vmatmul.mubr.f32.gmra.mrb[0].mxu0 %v130
    %v201 = vpop.f32.mrb[0].mxu0
    %v202 = vadd.f32 0.0, %v201
    %v203 = vpop.f32.mrb[0].mxu0
    %204 = vmatprep.mubr.f32.mxu0 0.0
    %205 = vmatmul.mubr.f32.gmra.mrb[0].mxu0 %v133
    %v206 = vpop.f32.mrb[0].mxu0
    %v207 = vadd.f32 0.0, %v206
    %v208 = vpop.f32.mrb[0].mxu0
    %209 = vdwg.mxu0
    %212 = vrot.lane.b32.xlu0 %v26, 4
    %v213 = vpop.permute.xlu0 %212
    %214 = vrot.lane.b32.xlu0 %v27, 4
    %v215 = vpop.permute.xlu0 %214
    %220 = vrot.lane.b32.xlu0 %v202, 8
    %v221 = vpop.permute.xlu0 %220
    %222 = vrot.lane.b32.xlu0 %v207, 8
    %v223 = vpop.permute.xlu0 %222
    %vm226 = vcmask 31744
    %v227 = vsel %vm226, %v119, %v213
    %v228 = vsel %vm226, %v124, %v215
    %vm229 = vcmask 64512
    %v230 = vsel %vm229, %v227, %v221
    %v231 = vsel %vm229, %v228, %v223
    %v232 = vld [vmem:[#allocation2] sm:$0xff]
    %v233 = vld [vmem:[#allocation2 + $0x8] sm:$0xf]
    %v234 = vld [vmem:[#allocation2 + $0x10] sm:$0x1]
    %v235 = vlaneseq
    %v236 = vshrl.u32 %v235, 7
    %v237 = vsub.s32 0, %v236
    %v238 = vrot.slane %v234, %v237
    %vm239 = vcmask 97280
    %v241 = vsel %vm239, %v230, 0
    %v244 = vsel %vm239, %v231, 0
    %vm246 = vcmask 1043456
    %v248 = vsel %vm246, %v233, 0
    %250 = vmatprep.subr.mxu0 0.0
    %251 = vmatpush1.msra.mxu0 %v232
    %252 = vmatprep.subr.mxu0 0.0
    %253 = vmatpush1.msra.mxu0 %v248
    %254 = vmatprep.subr.mxu0 0.0
    %255 = vmatpush1.msra.mxu0 0.0
    %256 = vmatprep.subr.mxu0 0.0
    %257 = vmatpush1.msra.mxu0 0.0
    %258 = vmatprep.subr.mxu0 0.0
    %259 = vmatpush1.msra.mxu0 0.0
    %260 = vmatprep.subr.mxu0 0.0
    %261 = vmatpush1.msra.mxu0 0.0
    %262 = vmatprep.subr.mxu0 0.0
    %263 = vmatpush1.msra.mxu0 0.0
    %264 = vmatprep.subr.mxu0 0.0
    %265 = vmatpush1.msra.mxu0 0.0
    %266 = vmatprep.subr.mxu0 0.0
    %267 = vmatpush1.msra.mxu0 0.0
    %268 = vmatprep.subr.mxu0 0.0
    %269 = vmatpush1.msra.mxu0 0.0
    %270 = vmatprep.subr.mxu0 0.0
    %271 = vmatpush1.msra.mxu0 0.0
    %272 = vmatprep.subr.mxu0 0.0
    %273 = vmatpush1.msra.mxu0 0.0
    %274 = vmatprep.subr.mxu0 0.0
    %275 = vmatpush1.msra.mxu0 0.0
    %276 = vmatprep.subr.mxu0 0.0
    %277 = vmatpush1.msra.mxu0 0.0
    %278 = vmatprep.subr.mxu0 0.0
    %279 = vmatpush1.msra.mxu0 0.0
    %280 = vmatprep.subr.mxu0 0.0
    %281 = vmatpush1.msra.mxu0 0.0
    %282 = vmatprep.subr.mxu0 0.0
    %283 = vmatpush1.msra.mxu0 0.0
    %284 = vmatprep.subr.mxu0 0.0
    %285 = vmatpush1.msra.mxu0 0.0
    %286 = vmatprep.subr.mxu0 0.0
    %287 = vmatpush1.msra.mxu0 0.0
    %288 = vmatprep.subr.mxu0 0.0
    %289 = vmatpush1.msra.mxu0 0.0
    %290 = vmatprep.subr.mxu0 0.0
    %291 = vmatpush1.msra.mxu0 0.0
    %292 = vmatprep.subr.mxu0 0.0
    %293 = vmatpush1.msra.mxu0 0.0
    %294 = vmatprep.subr.mxu0 0.0
    %295 = vmatpush1.msra.mxu0 0.0
    %296 = vmatprep.subr.mxu0 0.0
    %297 = vmatpush1.msra.mxu0 0.0
    %298 = vmatprep.subr.mxu0 0.0
    %299 = vmatpush1.msra.mxu0 0.0
    %300 = vmatprep.subr.mxu0 0.0
    %301 = vmatpush1.msra.mxu0 0.0
    %302 = vmatprep.subr.mxu0 0.0
    %303 = vmatpush1.msra.mxu0 0.0
    %304 = vmatprep.subr.mxu0 0.0
    %305 = vmatpush1.msra.mxu0 0.0
    %306 = vmatprep.subr.mxu0 0.0
    %307 = vmatpush1.msra.mxu0 0.0
    %308 = vmatprep.subr.mxu0 0.0
    %309 = vmatpush1.msra.mxu0 0.0
    %310 = vmatprep.subr.mxu0 0.0
    %311 = vmatpush1.msra.mxu0 0.0
    %312 = vmatprep.subr.mxu0 0.0
    %313 = vmatpush1.msra.mxu0 0.0
    %314 = vmatprep.mubr.f32.mxu0 0.0
    %315 = vmatmul.mubr.f32.gmra.mrb[0].mxu0 %v241
    %v316 = vpop.f32.mrb[0].mxu0
    %v317 = vadd.f32 %v238, %v316
    %v318 = vpop.f32.mrb[0].mxu0
    %319 = vmatprep.mubr.f32.mxu0 0.0
    %320 = vmatmul.mubr.f32.gmra.mrb[0].mxu0 %v244
    %v321 = vpop.f32.mrb[0].mxu0
    %v322 = vadd.f32 %v238, %v321
    %v323 = vpop.f32.mrb[0].mxu0
    %324 = vdwg.mxu0
    %v325 = vtanh.pop %v317
    %v326 = vtanh.pop %v322
    %v327 = vld [vmem:[#allocation2 + $0xd0] sm:$0xff]
    %v328 = vld [vmem:[#allocation2 + $0xd8] sm:$0x3f]
    %v330 = vsel %vm45, %v327, 0
    %v333 = vsel %vm45, %v328, 0
    %335 = vmatprep.subr.mxu0 0.0
    %336 = vmatpush1.msra.mxu0 %v325
    %337 = vmatprep.subr.mxu0 0.0
    %338 = vmatpush1.msra.mxu0 %v326
    %339 = vmatprep.subr.mxu0 0.0
    %340 = vmatpush1.msra.mxu0 0.0
    %341 = vmatprep.subr.mxu0 0.0
    %342 = vmatpush1.msra.mxu0 0.0
    %343 = vmatprep.subr.mxu0 0.0
    %344 = vmatpush1.msra.mxu0 0.0
    %345 = vmatprep.subr.mxu0 0.0
    %346 = vmatpush1.msra.mxu0 0.0
    %347 = vmatprep.subr.mxu0 0.0
    %348 = vmatpush1.msra.mxu0 0.0
    %349 = vmatprep.subr.mxu0 0.0
    %350 = vmatpush1.msra.mxu0 0.0
    %351 = vmatprep.subr.mxu0 0.0
    %352 = vmatpush1.msra.mxu0 0.0
    %353 = vmatprep.subr.mxu0 0.0
    %354 = vmatpush1.msra.mxu0 0.0
    %355 = vmatprep.subr.mxu0 0.0
    %356 = vmatpush1.msra.mxu0 0.0
    %357 = vmatprep.subr.mxu0 0.0
    %358 = vmatpush1.msra.mxu0 0.0
    %359 = vmatprep.subr.mxu0 0.0
    %360 = vmatpush1.msra.mxu0 0.0
    %361 = vmatprep.subr.mxu0 0.0
    %362 = vmatpush1.msra.mxu0 0.0
    %363 = vmatprep.subr.mxu0 0.0
    %364 = vmatpush1.msra.mxu0 0.0
    %365 = vmatprep.subr.mxu0 0.0
    %366 = vmatpush1.msra.mxu0 0.0
    %367 = vmatprep.subr.mxu0 0.0
    %368 = vmatpush1.msra.mxu0 0.0
    %369 = vmatprep.subr.mxu0 0.0
    %370 = vmatpush1.msra.mxu0 0.0
    %371 = vmatprep.subr.mxu0 0.0
    %372 = vmatpush1.msra.mxu0 0.0
    %373 = vmatprep.subr.mxu0 0.0
    %374 = vmatpush1.msra.mxu0 0.0
    %375 = vmatprep.subr.mxu0 0.0
    %376 = vmatpush1.msra.mxu0 0.0
    %377 = vmatprep.subr.mxu0 0.0
    %378 = vmatpush1.msra.mxu0 0.0
    %379 = vmatprep.subr.mxu0 0.0
    %380 = vmatpush1.msra.mxu0 0.0
    %381 = vmatprep.subr.mxu0 0.0
    %382 = vmatpush1.msra.mxu0 0.0
    %383 = vmatprep.subr.mxu0 0.0
    %384 = vmatpush1.msra.mxu0 0.0
    %385 = vmatprep.subr.mxu0 0.0
    %386 = vmatpush1.msra.mxu0 0.0
    %387 = vmatprep.subr.mxu0 0.0
    %388 = vmatpush1.msra.mxu0 0.0
    %389 = vmatprep.subr.mxu0 0.0
    %390 = vmatpush1.msra.mxu0 0.0
    %391 = vmatprep.subr.mxu0 0.0
    %392 = vmatpush1.msra.mxu0 0.0
    %393 = vmatprep.subr.mxu0 0.0
    %394 = vmatpush1.msra.mxu0 0.0
    %395 = vmatprep.subr.mxu0 0.0
    %396 = vmatpush1.msra.mxu0 0.0
    %397 = vmatprep.subr.mxu0 0.0
    %398 = vmatpush1.msra.mxu0 0.0
    %399 = vmatprep.mubr.f32.mxu0 0.0
    %400 = vmatmul.mubr.f32.gmra.mrb[0].mxu0 %v330
    %v401 = vpop.f32.mrb[0].mxu0
    %v402 = vadd.f32 0.0, %v401
    %v403 = vpop.f32.mrb[0].mxu0
    %404 = vmatprep.mubr.f32.mxu0 0.0
    %405 = vmatmul.mubr.f32.gmra.mrb[0].mxu0 %v333
    %v406 = vpop.f32.mrb[0].mxu0
    %v407 = vadd.f32 0.0, %v406
    %v408 = vpop.f32.mrb[0].mxu0
    %409 = vdwg.mxu0
    %v410 = vld [vmem:[#allocation2 + $0xe0] sm:$0xff]
    %v411 = vld [vmem:[#allocation2 + $0xe8] sm:$0x3f]
    %v413 = vsel %vm45, %v410, 0
    %v416 = vsel %vm45, %v411, 0
    %418 = vmatprep.subr.mxu0 0.0
    %419 = vmatpush1.msra.mxu0 %v325
    %420 = vmatprep.subr.mxu0 0.0
    %421 = vmatpush1.msra.mxu0 %v326
    %422 = vmatprep.subr.mxu0 0.0
    %423 = vmatpush1.msra.mxu0 0.0
    %424 = vmatprep.subr.mxu0 0.0
    %425 = vmatpush1.msra.mxu0 0.0
    %426 = vmatprep.subr.mxu0 0.0
    %427 = vmatpush1.msra.mxu0 0.0
    %428 = vmatprep.subr.mxu0 0.0
    %429 = vmatpush1.msra.mxu0 0.0
    %430 = vmatprep.subr.mxu0 0.0
    %431 = vmatpush1.msra.mxu0 0.0
    %432 = vmatprep.subr.mxu0 0.0
    %433 = vmatpush1.msra.mxu0 0.0
    %434 = vmatprep.subr.mxu0 0.0
    %435 = vmatpush1.msra.mxu0 0.0
    %436 = vmatprep.subr.mxu0 0.0
    %437 = vmatpush1.msra.mxu0 0.0
    %438 = vmatprep.subr.mxu0 0.0
    %439 = vmatpush1.msra.mxu0 0.0
    %440 = vmatprep.subr.mxu0 0.0
    %441 = vmatpush1.msra.mxu0 0.0
    %442 = vmatprep.subr.mxu0 0.0
    %443 = vmatpush1.msra.mxu0 0.0
    %444 = vmatprep.subr.mxu0 0.0
    %445 = vmatpush1.msra.mxu0 0.0
    %446 = vmatprep.subr.mxu0 0.0
    %447 = vmatpush1.msra.mxu0 0.0
    %448 = vmatprep.subr.mxu0 0.0
    %449 = vmatpush1.msra.mxu0 0.0
    %450 = vmatprep.subr.mxu0 0.0
    %451 = vmatpush1.msra.mxu0 0.0
    %452 = vmatprep.subr.mxu0 0.0
    %453 = vmatpush1.msra.mxu0 0.0
    %454 = vmatprep.subr.mxu0 0.0
    %455 = vmatpush1.msra.mxu0 0.0
    %456 = vmatprep.subr.mxu0 0.0
    %457 = vmatpush1.msra.mxu0 0.0
    %458 = vmatprep.subr.mxu0 0.0
    %459 = vmatpush1.msra.mxu0 0.0
    %460 = vmatprep.subr.mxu0 0.0
    %461 = vmatpush1.msra.mxu0 0.0
    %462 = vmatprep.subr.mxu0 0.0
    %463 = vmatpush1.msra.mxu0 0.0
    %464 = vmatprep.subr.mxu0 0.0
    %465 = vmatpush1.msra.mxu0 0.0
    %466 = vmatprep.subr.mxu0 0.0
    %467 = vmatpush1.msra.mxu0 0.0
    %468 = vmatprep.subr.mxu0 0.0
    %469 = vmatpush1.msra.mxu0 0.0
    %470 = vmatprep.subr.mxu0 0.0
    %471 = vmatpush1.msra.mxu0 0.0
    %472 = vmatprep.subr.mxu0 0.0
    %473 = vmatpush1.msra.mxu0 0.0
    %474 = vmatprep.subr.mxu0 0.0
    %475 = vmatpush1.msra.mxu0 0.0
    %476 = vmatprep.subr.mxu0 0.0
    %477 = vmatpush1.msra.mxu0 0.0
    %478 = vmatprep.subr.mxu0 0.0
    %479 = vmatpush1.msra.mxu0 0.0
    %480 = vmatprep.subr.mxu0 0.0
    %481 = vmatpush1.msra.mxu0 0.0
    %482 = vmatprep.mubr.f32.mxu0 0.0
    %483 = vmatmul.mubr.f32.gmra.mrb[0].mxu0 %v413
    %v484 = vpop.f32.mrb[0].mxu0
    %v485 = vadd.f32 0.0, %v484
    %v486 = vpop.f32.mrb[0].mxu0
    %487 = vmatprep.mubr.f32.mxu0 0.0
    %488 = vmatmul.mubr.f32.gmra.mrb[0].mxu0 %v416
    %v489 = vpop.f32.mrb[0].mxu0
    %v490 = vadd.f32 0.0, %v489
    %v491 = vpop.f32.mrb[0].mxu0
    %492 = vdwg.mxu0
    %v493 = vadd.f32 %v402, %v485
    %v494 = vadd.f32 %v407, %v490
    %v495 = vld [vmem:[#allocation2 + $0x100] sm:$0xf]
    %v497 = vsel %vm226, %v402, 0
    %v500 = vsel %vm226, %v407, 0
    %v503 = vsel %vm246, %v495, 0
    %505 = vmatprep.subr.mxu0 0.0
    %506 = vmatpush1.msra.mxu0 %v503
    %507 = vmatprep.subr.mxu0 0.0
    %508 = vmatpush1.msra.mxu0 0.0
    %509 = vmatprep.subr.mxu0 0.0
    %510 = vmatpush1.msra.mxu0 0.0
    %511 = vmatprep.subr.mxu0 0.0
    %512 = vmatpush1.msra.mxu0 0.0
    %513 = vmatprep.subr.mxu0 0.0
    %514 = vmatpush1.msra.mxu0 0.0
    %515 = vmatprep.subr.mxu0 0.0
    %516 = vmatpush1.msra.mxu0 0.0
    %517 = vmatprep.subr.mxu0 0.0
    %518 = vmatpush1.msra.mxu0 0.0
    %519 = vmatprep.subr.mxu0 0.0
    %520 = vmatpush1.msra.mxu0 0.0
    %521 = vmatprep.subr.mxu0 0.0
    %522 = vmatpush1.msra.mxu0 0.0
    %523 = vmatprep.subr.mxu0 0.0
    %524 = vmatpush1.msra.mxu0 0.0
    %525 = vmatprep.subr.mxu0 0.0
    %526 = vmatpush1.msra.mxu0 0.0
    %527 = vmatprep.subr.mxu0 0.0
    %528 = vmatpush1.msra.mxu0 0.0
    %529 = vmatprep.subr.mxu0 0.0
    %530 = vmatpush1.msra.mxu0 0.0
    %531 = vmatprep.subr.mxu0 0.0
    %532 = vmatpush1.msra.mxu0 0.0
    %533 = vmatprep.subr.mxu0 0.0
    %534 = vmatpush1.msra.mxu0 0.0
    %535 = vmatprep.subr.mxu0 0.0
    %536 = vmatpush1.msra.mxu0 0.0
    %537 = vmatprep.subr.mxu0 0.0
    %538 = vmatpush1.msra.mxu0 0.0
    %539 = vmatprep.subr.mxu0 0.0
    %540 = vmatpush1.msra.mxu0 0.0
    %541 = vmatprep.subr.mxu0 0.0
    %542 = vmatpush1.msra.mxu0 0.0
    %543 = vmatprep.subr.mxu0 0.0
    %544 = vmatpush1.msra.mxu0 0.0
    %545 = vmatprep.subr.mxu0 0.0
    %546 = vmatpush1.msra.mxu0 0.0
    %547 = vmatprep.subr.mxu0 0.0
    %548 = vmatpush1.msra.mxu0 0.0
    %549 = vmatprep.subr.mxu0 0.0
    %550 = vmatpush1.msra.mxu0 0.0
    %551 = vmatprep.subr.mxu0 0.0
    %552 = vmatpush1.msra.mxu0 0.0
    %553 = vmatprep.subr.mxu0 0.0
    %554 = vmatpush1.msra.mxu0 0.0
    %555 = vmatprep.subr.mxu0 0.0
    %556 = vmatpush1.msra.mxu0 0.0
    %557 = vmatprep.subr.mxu0 0.0
    %558 = vmatpush1.msra.mxu0 0.0
    %559 = vmatprep.subr.mxu0 0.0
    %560 = vmatpush1.msra.mxu0 0.0
    %561 = vmatprep.subr.mxu0 0.0
    %562 = vmatpush1.msra.mxu0 0.0
    %563 = vmatprep.subr.mxu0 0.0
    %564 = vmatpush1.msra.mxu0 0.0
    %565 = vmatprep.subr.mxu0 0.0
    %566 = vmatpush1.msra.mxu0 0.0
    %567 = vmatprep.subr.mxu0 0.0
    %568 = vmatpush1.msra.mxu0 0.0
    %569 = vmatprep.mubr.f32.mxu0 0.0
    %570 = vmatmul.mubr.f32.gmra.mrb[0].mxu0 %v497
    %v571 = vpop.f32.mrb[0].mxu0
    %v572 = vadd.f32 0.0, %v571
    %v573 = vpop.f32.mrb[0].mxu0
    %574 = vmatprep.mubr.f32.mxu0 0.0
    %575 = vmatmul.mubr.f32.gmra.mrb[0].mxu0 %v500
    %v576 = vpop.f32.mrb[0].mxu0
    %v577 = vadd.f32 0.0, %v576
    %v578 = vpop.f32.mrb[0].mxu0
    %579 = vdwg.mxu0
    %v580 = vld [vmem:[#allocation2 + $0x108] sm:$0xf]
    %v582 = vsel %vm226, %v485, 0
    %v585 = vsel %vm226, %v490, 0
    %v588 = vsel %vm246, %v580, 0
    %590 = vmatprep.subr.mxu0 0.0
    %591 = vmatpush1.msra.mxu0 %v588
    %592 = vmatprep.subr.mxu0 0.0
    %593 = vmatpush1.msra.mxu0 0.0
    %594 = vmatprep.subr.mxu0 0.0
    %595 = vmatpush1.msra.mxu0 0.0
    %596 = vmatprep.subr.mxu0 0.0
    %597 = vmatpush1.msra.mxu0 0.0
    %598 = vmatprep.subr.mxu0 0.0
    %599 = vmatpush1.msra.mxu0 0.0
    %600 = vmatprep.subr.mxu0 0.0
    %601 = vmatpush1.msra.mxu0 0.0
    %602 = vmatprep.subr.mxu0 0.0
    %603 = vmatpush1.msra.mxu0 0.0
    %604 = vmatprep.subr.mxu0 0.0
    %605 = vmatpush1.msra.mxu0 0.0
    %606 = vmatprep.subr.mxu0 0.0
    %607 = vmatpush1.msra.mxu0 0.0
    %608 = vmatprep.subr.mxu0 0.0
    %609 = vmatpush1.msra.mxu0 0.0
    %610 = vmatprep.subr.mxu0 0.0
    %611 = vmatpush1.msra.mxu0 0.0
    %612 = vmatprep.subr.mxu0 0.0
    %613 = vmatpush1.msra.mxu0 0.0
    %614 = vmatprep.subr.mxu0 0.0
    %615 = vmatpush1.msra.mxu0 0.0
    %616 = vmatprep.subr.mxu0 0.0
    %617 = vmatpush1.msra.mxu0 0.0
    %618 = vmatprep.subr.mxu0 0.0
    %619 = vmatpush1.msra.mxu0 0.0
    %620 = vmatprep.subr.mxu0 0.0
    %621 = vmatpush1.msra.mxu0 0.0
    %622 = vmatprep.subr.mxu0 0.0
    %623 = vmatpush1.msra.mxu0 0.0
    %624 = vmatprep.subr.mxu0 0.0
    %625 = vmatpush1.msra.mxu0 0.0
    %626 = vmatprep.subr.mxu0 0.0
    %627 = vmatpush1.msra.mxu0 0.0
    %628 = vmatprep.subr.mxu0 0.0
    %629 = vmatpush1.msra.mxu0 0.0
    %630 = vmatprep.subr.mxu0 0.0
    %631 = vmatpush1.msra.mxu0 0.0
    %632 = vmatprep.subr.mxu0 0.0
    %633 = vmatpush1.msra.mxu0 0.0
    %634 = vmatprep.subr.mxu0 0.0
    %635 = vmatpush1.msra.mxu0 0.0
    %636 = vmatprep.subr.mxu0 0.0
    %637 = vmatpush1.msra.mxu0 0.0
    %638 = vmatprep.subr.mxu0 0.0
    %639 = vmatpush1.msra.mxu0 0.0
    %640 = vmatprep.subr.mxu0 0.0
    %641 = vmatpush1.msra.mxu0 0.0
    %642 = vmatprep.subr.mxu0 0.0
    %643 = vmatpush1.msra.mxu0 0.0
    %644 = vmatprep.subr.mxu0 0.0
    %645 = vmatpush1.msra.mxu0 0.0
    %646 = vmatprep.subr.mxu0 0.0
    %647 = vmatpush1.msra.mxu0 0.0
    %648 = vmatprep.subr.mxu0 0.0
    %649 = vmatpush1.msra.mxu0 0.0
    %650 = vmatprep.subr.mxu0 0.0
    %651 = vmatpush1.msra.mxu0 0.0
    %652 = vmatprep.subr.mxu0 0.0
    %653 = vmatpush1.msra.mxu0 0.0
    %654 = vmatprep.mubr.f32.mxu0 0.0
    %655 = vmatmul.mubr.f32.gmra.mrb[0].mxu0 %v582
    %v656 = vpop.f32.mrb[0].mxu0
    %v657 = vadd.f32 0.0, %v656
    %v658 = vpop.f32.mrb[0].mxu0
    %659 = vmatprep.mubr.f32.mxu0 0.0
    %660 = vmatmul.mubr.f32.gmra.mrb[0].mxu0 %v585
    %v661 = vpop.f32.mrb[0].mxu0
    %v662 = vadd.f32 0.0, %v661
    %v663 = vpop.f32.mrb[0].mxu0
    %664 = vdwg.mxu0
    %v665 = vmul.f32 %v572, %v657
    %v666 = vmul.f32 %v577, %v662
    %v667 = vld [vmem:[#allocation2 + $0x110] sm:$0xff]
    %v668 = vld [vmem:[#allocation2 + $0x118] sm:$0xff]
    %v670 = vsel %vm45, %v665, 0
    %v673 = vsel %vm45, %v666, 0
    %675 = vmatprep.subr.mxu0 0.0
    %676 = vmatpush1.msra.mxu0 %v667
    %677 = vmatprep.subr.mxu0 0.0
    %678 = vmatpush1.msra.mxu0 %v668
    %679 = vmatprep.subr.mxu0 0.0
    %680 = vmatpush1.msra.mxu0 0.0
    %681 = vmatprep.subr.mxu0 0.0
    %682 = vmatpush1.msra.mxu0 0.0
    %683 = vmatprep.subr.mxu0 0.0
    %684 = vmatpush1.msra.mxu0 0.0
    %685 = vmatprep.subr.mxu0 0.0
    %686 = vmatpush1.msra.mxu0 0.0
    %687 = vmatprep.subr.mxu0 0.0
    %688 = vmatpush1.msra.mxu0 0.0
    %689 = vmatprep.subr.mxu0 0.0
    %690 = vmatpush1.msra.mxu0 0.0
    %691 = vmatprep.subr.mxu0 0.0
    %692 = vmatpush1.msra.mxu0 0.0
    %693 = vmatprep.subr.mxu0 0.0
    %694 = vmatpush1.msra.mxu0 0.0
    %695 = vmatprep.subr.mxu0 0.0
    %696 = vmatpush1.msra.mxu0 0.0
    %697 = vmatprep.subr.mxu0 0.0
    %698 = vmatpush1.msra.mxu0 0.0
    %699 = vmatprep.subr.mxu0 0.0
    %700 = vmatpush1.msra.mxu0 0.0
    %701 = vmatprep.subr.mxu0 0.0
    %702 = vmatpush1.msra.mxu0 0.0
    %703 = vmatprep.subr.mxu0 0.0
    %704 = vmatpush1.msra.mxu0 0.0
    %705 = vmatprep.subr.mxu0 0.0
    %706 = vmatpush1.msra.mxu0 0.0
    %707 = vmatprep.subr.mxu0 0.0
    %708 = vmatpush1.msra.mxu0 0.0
    %709 = vmatprep.subr.mxu0 0.0
    %710 = vmatpush1.msra.mxu0 0.0
    %711 = vmatprep.subr.mxu0 0.0
    %712 = vmatpush1.msra.mxu0 0.0
    %713 = vmatprep.subr.mxu0 0.0
    %714 = vmatpush1.msra.mxu0 0.0
    %715 = vmatprep.subr.mxu0 0.0
    %716 = vmatpush1.msra.mxu0 0.0
    %717 = vmatprep.subr.mxu0 0.0
    %718 = vmatpush1.msra.mxu0 0.0
    %719 = vmatprep.subr.mxu0 0.0
    %720 = vmatpush1.msra.mxu0 0.0
    %721 = vmatprep.subr.mxu0 0.0
    %722 = vmatpush1.msra.mxu0 0.0
    %723 = vmatprep.subr.mxu0 0.0
    %724 = vmatpush1.msra.mxu0 0.0
    %725 = vmatprep.subr.mxu0 0.0
    %726 = vmatpush1.msra.mxu0 0.0
    %727 = vmatprep.subr.mxu0 0.0
    %728 = vmatpush1.msra.mxu0 0.0
    %729 = vmatprep.subr.mxu0 0.0
    %730 = vmatpush1.msra.mxu0 0.0
    %731 = vmatprep.subr.mxu0 0.0
    %732 = vmatpush1.msra.mxu0 0.0
    %733 = vmatprep.subr.mxu0 0.0
    %734 = vmatpush1.msra.mxu0 0.0
    %735 = vmatprep.subr.mxu0 0.0
    %736 = vmatpush1.msra.mxu0 0.0
    %737 = vmatprep.subr.mxu0 0.0
    %738 = vmatpush1.msra.mxu0 0.0
    %739 = vmatprep.mubr.f32.mxu0 0.0
    %740 = vmatmul.mubr.f32.gmra.mrb[0].mxu0 %v670
    %v741 = vpop.f32.mrb[0].mxu0
    %v742 = vadd.f32 0.0, %v741
    %v743 = vpop.f32.mrb[0].mxu0
    %744 = vmatprep.mubr.f32.mxu0 0.0
    %745 = vmatmul.mubr.f32.gmra.mrb[0].mxu0 %v673
    %v746 = vpop.f32.mrb[0].mxu0
    %v747 = vadd.f32 0.0, %v746
    %v748 = vpop.f32.mrb[0].mxu0
    %749 = vdwg.mxu0
    %v750 = vld [vmem:[#allocation2 + $0xf0] sm:$0xff]
    %v751 = vld [vmem:[#allocation2 + $0xf8] sm:$0x3f]
    %vm752 = vcmask 113664
    %v754 = vsel %vm752, %v750, 0
    %v757 = vsel %vm752, %v751, 0
    %vm759 = vcmask 1045504
    %v761 = vsel %vm759, %v747, 0
    %763 = vmatprep.subr.mxu0 0.0
    %764 = vmatpush1.msra.mxu0 %v742
    %765 = vmatprep.subr.mxu0 0.0
    %766 = vmatpush1.msra.mxu0 %v761
    %767 = vmatprep.subr.mxu0 0.0
    %768 = vmatpush1.msra.mxu0 0.0
    %769 = vmatprep.subr.mxu0 0.0
    %770 = vmatpush1.msra.mxu0 0.0
    %771 = vmatprep.subr.mxu0 0.0
    %772 = vmatpush1.msra.mxu0 0.0
    %773 = vmatprep.subr.mxu0 0.0
    %774 = vmatpush1.msra.mxu0 0.0
    %775 = vmatprep.subr.mxu0 0.0
    %776 = vmatpush1.msra.mxu0 0.0
    %777 = vmatprep.subr.mxu0 0.0
    %778 = vmatpush1.msra.mxu0 0.0
    %779 = vmatprep.subr.mxu0 0.0
    %780 = vmatpush1.msra.mxu0 0.0
    %781 = vmatprep.subr.mxu0 0.0
    %782 = vmatpush1.msra.mxu0 0.0
    %783 = vmatprep.subr.mxu0 0.0
    %784 = vmatpush1.msra.mxu0 0.0
    %785 = vmatprep.subr.mxu0 0.0
    %786 = vmatpush1.msra.mxu0 0.0
    %787 = vmatprep.subr.mxu0 0.0
    %788 = vmatpush1.msra.mxu0 0.0
    %789 = vmatprep.subr.mxu0 0.0
    %790 = vmatpush1.msra.mxu0 0.0
    %791 = vmatprep.subr.mxu0 0.0
    %792 = vmatpush1.msra.mxu0 0.0
    %793 = vmatprep.subr.mxu0 0.0
    %794 = vmatpush1.msra.mxu0 0.0
    %795 = vmatprep.subr.mxu0 0.0
    %796 = vmatpush1.msra.mxu0 0.0
    %797 = vmatprep.subr.mxu0 0.0
    %798 = vmatpush1.msra.mxu0 0.0
    %799 = vmatprep.subr.mxu0 0.0
    %800 = vmatpush1.msra.mxu0 0.0
    %801 = vmatprep.subr.mxu0 0.0
    %802 = vmatpush1.msra.mxu0 0.0
    %803 = vmatprep.subr.mxu0 0.0
    %804 = vmatpush1.msra.mxu0 0.0
    %805 = vmatprep.subr.mxu0 0.0
    %806 = vmatpush1.msra.mxu0 0.0
    %807 = vmatprep.subr.mxu0 0.0
    %808 = vmatpush1.msra.mxu0 0.0
    %809 = vmatprep.subr.mxu0 0.0
    %810 = vmatpush1.msra.mxu0 0.0
    %811 = vmatprep.subr.mxu0 0.0
    %812 = vmatpush1.msra.mxu0 0.0
    %813 = vmatprep.subr.mxu0 0.0
    %814 = vmatpush1.msra.mxu0 0.0
    %815 = vmatprep.subr.mxu0 0.0
    %816 = vmatpush1.msra.mxu0 0.0
    %817 = vmatprep.subr.mxu0 0.0
    %818 = vmatpush1.msra.mxu0 0.0
    %819 = vmatprep.subr.mxu0 0.0
    %820 = vmatpush1.msra.mxu0 0.0
    %821 = vmatprep.subr.mxu0 0.0
    %822 = vmatpush1.msra.mxu0 0.0
    %823 = vmatprep.subr.mxu0 0.0
    %824 = vmatpush1.msra.mxu0 0.0
    %825 = vmatprep.subr.mxu0 0.0
    %826 = vmatpush1.msra.mxu0 0.0
    %827 = vmatprep.mubr.f32.mxu0 0.0
    %828 = vmatmul.mubr.f32.gmra.mrb[0].mxu0 %v754
    %v829 = vpop.f32.mrb[0].mxu0
    %v830 = vadd.f32 0.0, %v829
    %v831 = vpop.f32.mrb[0].mxu0
    %832 = vmatprep.mubr.f32.mxu0 0.0
    %833 = vmatmul.mubr.f32.gmra.mrb[0].mxu0 %v757
    %v834 = vpop.f32.mrb[0].mxu0
    %v835 = vadd.f32 0.0, %v834
    %v836 = vpop.f32.mrb[0].mxu0
    %837 = vdwg.mxu0
    %840 = vrot.lane.b32.xlu0 %v830, 4
    %v841 = vpop.permute.xlu0 %840
    %842 = vrot.lane.b32.xlu0 %v835, 4
    %v843 = vpop.permute.xlu0 %842
    %v846 = vsel %vm226, %v493, %v841
    %v847 = vsel %vm226, %v494, %v843
    %v848 = vld [vmem:[#allocation2 + $0x28] sm:$0xff]
    %v849 = vld [vmem:[#allocation2 + $0x18] sm:$0xff]
    %v850 = vld [vmem:[#allocation2 + $0x20] sm:$0x3]
    %v851 = vld [vmem:[#allocation2 + $0x30] sm:$0x1]
    %v852 = vlaneseq
    %v853 = vshrl.u32 %v852, 7
    %v854 = vsub.s32 0, %v853
    %v855 = vrot.slane %v851, %v854
    %vm856 = vcmask 80896
    %v858 = vsel %vm856, %v846, 0
    %v861 = vsel %vm856, %v847, 0
    %vm863 = vcmask 1041408
    %v865 = vsel %vm863, %v850, 0
    %867 = vmatprep.subr.mxu0 0.0
    %868 = vmatpush1.msra.mxu0 %v849
    %869 = vmatprep.subr.mxu0 0.0
    %870 = vmatpush1.msra.mxu0 %v865
    %871 = vmatprep.subr.mxu0 0.0
    %872 = vmatpush1.msra.mxu0 0.0
    %873 = vmatprep.subr.mxu0 0.0
    %874 = vmatpush1.msra.mxu0 0.0
    %875 = vmatprep.subr.mxu0 0.0
    %876 = vmatpush1.msra.mxu0 0.0
    %877 = vmatprep.subr.mxu0 0.0
    %878 = vmatpush1.msra.mxu0 0.0
    %879 = vmatprep.subr.mxu0 0.0
    %880 = vmatpush1.msra.mxu0 0.0
    %881 = vmatprep.subr.mxu0 0.0
    %882 = vmatpush1.msra.mxu0 0.0
    %883 = vmatprep.subr.mxu0 0.0
    %884 = vmatpush1.msra.mxu0 0.0
    %885 = vmatprep.subr.mxu0 0.0
    %886 = vmatpush1.msra.mxu0 0.0
    %887 = vmatprep.subr.mxu0 0.0
    %888 = vmatpush1.msra.mxu0 0.0
    %889 = vmatprep.subr.mxu0 0.0
    %890 = vmatpush1.msra.mxu0 0.0
    %891 = vmatprep.subr.mxu0 0.0
    %892 = vmatpush1.msra.mxu0 0.0
    %893 = vmatprep.subr.mxu0 0.0
    %894 = vmatpush1.msra.mxu0 0.0
    %895 = vmatprep.subr.mxu0 0.0
    %896 = vmatpush1.msra.mxu0 0.0
    %897 = vmatprep.subr.mxu0 0.0
    %898 = vmatpush1.msra.mxu0 0.0
    %899 = vmatprep.subr.mxu0 0.0
    %900 = vmatpush1.msra.mxu0 0.0
    %901 = vmatprep.subr.mxu0 0.0
    %902 = vmatpush1.msra.mxu0 0.0
    %903 = vmatprep.subr.mxu0 0.0
    %904 = vmatpush1.msra.mxu0 0.0
    %905 = vmatprep.subr.mxu0 0.0
    %906 = vmatpush1.msra.mxu0 0.0
    %907 = vmatprep.subr.mxu0 0.0
    %908 = vmatpush1.msra.mxu0 0.0
    %909 = vmatprep.subr.mxu0 0.0
    %910 = vmatpush1.msra.mxu0 0.0
    %911 = vmatprep.subr.mxu0 0.0
    %912 = vmatpush1.msra.mxu0 0.0
    %913 = vmatprep.subr.mxu0 0.0
    %914 = vmatpush1.msra.mxu0 0.0
    %915 = vmatprep.subr.mxu0 0.0
    %916 = vmatpush1.msra.mxu0 0.0
    %917 = vmatprep.subr.mxu0 0.0
    %918 = vmatpush1.msra.mxu0 0.0
    %919 = vmatprep.subr.mxu0 0.0
    %920 = vmatpush1.msra.mxu0 0.0
    %921 = vmatprep.subr.mxu0 0.0
    %922 = vmatpush1.msra.mxu0 0.0
    %923 = vmatprep.subr.mxu0 0.0
    %924 = vmatpush1.msra.mxu0 0.0
    %925 = vmatprep.subr.mxu0 0.0
    %926 = vmatpush1.msra.mxu0 0.0
    %927 = vmatprep.subr.mxu0 0.0
    %928 = vmatpush1.msra.mxu0 0.0
    %929 = vmatprep.subr.mxu0 0.0
    %930 = vmatpush1.msra.mxu0 0.0
    %931 = vmatprep.mubr.f32.mxu0 0.0
    %932 = vmatmul.mubr.f32.gmra.mrb[0].mxu0 %v858
    %v933 = vpop.f32.mrb[0].mxu0
    %v934 = vadd.f32 %v855, %v933
    %v935 = vpop.f32.mrb[0].mxu0
    %936 = vmatprep.mubr.f32.mxu0 0.0
    %937 = vmatmul.mubr.f32.gmra.mrb[0].mxu0 %v861
    %v938 = vpop.f32.mrb[0].mxu0
    %v939 = vadd.f32 %v855, %v938
    %v940 = vpop.f32.mrb[0].mxu0
    %941 = vdwg.mxu0
    %v943 = vsel %vm229, 0.0, 0
    %945 = vmatprep.subr.mxu0 0.0
    %946 = vmatpush1.msra.mxu0 %v848
    %947 = vmatprep.subr.mxu0 0.0
    %948 = vmatpush1.msra.mxu0 0.0
    %949 = vmatprep.subr.mxu0 0.0
    %950 = vmatpush1.msra.mxu0 0.0
    %951 = vmatprep.subr.mxu0 0.0
    %952 = vmatpush1.msra.mxu0 0.0
    %953 = vmatprep.subr.mxu0 0.0
    %954 = vmatpush1.msra.mxu0 0.0
    %955 = vmatprep.subr.mxu0 0.0
    %956 = vmatpush1.msra.mxu0 0.0
    %957 = vmatprep.subr.mxu0 0.0
    %958 = vmatpush1.msra.mxu0 0.0
    %959 = vmatprep.subr.mxu0 0.0
    %960 = vmatpush1.msra.mxu0 0.0
    %961 = vmatprep.subr.mxu0 0.0
    %962 = vmatpush1.msra.mxu0 0.0
    %963 = vmatprep.subr.mxu0 0.0
    %964 = vmatpush1.msra.mxu0 0.0
    %965 = vmatprep.subr.mxu0 0.0
    %966 = vmatpush1.msra.mxu0 0.0
    %967 = vmatprep.subr.mxu0 0.0
    %968 = vmatpush1.msra.mxu0 0.0
    %969 = vmatprep.subr.mxu0 0.0
    %970 = vmatpush1.msra.mxu0 0.0
    %971 = vmatprep.subr.mxu0 0.0
    %972 = vmatpush1.msra.mxu0 0.0
    %973 = vmatprep.subr.mxu0 0.0
    %974 = vmatpush1.msra.mxu0 0.0
    %975 = vmatprep.subr.mxu0 0.0
    %976 = vmatpush1.msra.mxu0 0.0
    %977 = vmatprep.subr.mxu0 0.0
    %978 = vmatpush1.msra.mxu0 0.0
    %979 = vmatprep.subr.mxu0 0.0
    %980 = vmatpush1.msra.mxu0 0.0
    %981 = vmatprep.subr.mxu0 0.0
    %982 = vmatpush1.msra.mxu0 0.0
    %983 = vmatprep.subr.mxu0 0.0
    %984 = vmatpush1.msra.mxu0 0.0
    %985 = vmatprep.subr.mxu0 0.0
    %986 = vmatpush1.msra.mxu0 0.0
    %987 = vmatprep.subr.mxu0 0.0
    %988 = vmatpush1.msra.mxu0 0.0
    %989 = vmatprep.subr.mxu0 0.0
    %990 = vmatpush1.msra.mxu0 0.0
    %991 = vmatprep.subr.mxu0 0.0
    %992 = vmatpush1.msra.mxu0 0.0
    %993 = vmatprep.subr.mxu0 0.0
    %994 = vmatpush1.msra.mxu0 0.0
    %995 = vmatprep.subr.mxu0 0.0
    %996 = vmatpush1.msra.mxu0 0.0
    %997 = vmatprep.subr.mxu0 0.0
    %998 = vmatpush1.msra.mxu0 0.0
    %999 = vmatprep.subr.mxu0 0.0
    %1000 = vmatpush1.msra.mxu0 0.0
    %1001 = vmatprep.subr.mxu0 0.0
    %1002 = vmatpush1.msra.mxu0 0.0
    %1003 = vmatprep.subr.mxu0 0.0
    %1004 = vmatpush1.msra.mxu0 0.0
    %1005 = vmatprep.subr.mxu0 0.0
    %1006 = vmatpush1.msra.mxu0 0.0
    %1007 = vmatprep.subr.mxu0 0.0
    %1008 = vmatpush1.msra.mxu0 0.0
    %1009 = vmatprep.mubr.f32.mxu0 0.0
    %1010 = vmatmul.mubr.f32.gmra.mrb[0].mxu0 %v943
    %v1011 = vpop.f32.mrb[0].mxu0
    %v1012 = vadd.f32 0.0, %v1011
    %v1013 = vpop.f32.mrb[0].mxu0
    %1014 = vdwg.mxu0
    %v1015 = vadd.f32 %v934, %v1012
    %v1016 = vxor.u32 %v1015, 2147483648
    %v1017 = vmul.f32 %v1016, 1.442695
    %v1018 = vpow.pop %v1017
    %v1019 = vadd.f32 %v1018, 1.0
    %v1020 = vrcp.pop %v1019
    %v1021 = vmul.f32 1.0, %v1020
    %v1022 = vtanh.pop %v1015
    %v1023 = vmul.f32 %v1021, 0.0
    %1025 = vrot.lane.b32.xlu0 %v1022, 104
    %v1026 = vpop.permute.xlu0 %1025
    %v1028 = vmul.f32 %v1021, %v1026
    %1030 = vrot.lane.b32.xlu0 %v1028, 8
    %v1031 = vpop.permute.xlu0 %1030
    %v1033 = vadd.f32 %v1023, %v1031
    %v1034 = vtanh.pop %v1033
    %1036 = vrot.lane.b32.xlu0 %v1034, 8
    %v1037 = vpop.permute.xlu0 %1036
    %v1039 = vmul.f32 %v1021, %v1037
    %1041 = vrot.lane.b32.xlu0 %v1039, 112
    %v1042 = vpop.permute.xlu0 %1041
    %v1043 = vsel %vm229, %v1042, 0
    %1045 = vmatprep.subr.mxu0 0.0
    %1046 = vmatpush1.msra.mxu0 %v848
    %1047 = vmatprep.subr.mxu0 0.0
    %1048 = vmatpush1.msra.mxu0 0.0
    %1049 = vmatprep.subr.mxu0 0.0
    %1050 = vmatpush1.msra.mxu0 0.0
    %1051 = vmatprep.subr.mxu0 0.0
    %1052 = vmatpush1.msra.mxu0 0.0
    %1053 = vmatprep.subr.mxu0 0.0
    %1054 = vmatpush1.msra.mxu0 0.0
    %1055 = vmatprep.subr.mxu0 0.0
    %1056 = vmatpush1.msra.mxu0 0.0
    %1057 = vmatprep.subr.mxu0 0.0
    %1058 = vmatpush1.msra.mxu0 0.0
    %1059 = vmatprep.subr.mxu0 0.0
    %1060 = vmatpush1.msra.mxu0 0.0
    %1061 = vmatprep.subr.mxu0 0.0
    %1062 = vmatpush1.msra.mxu0 0.0
    %1063 = vmatprep.subr.mxu0 0.0
    %1064 = vmatpush1.msra.mxu0 0.0
    %1065 = vmatprep.subr.mxu0 0.0
    %1066 = vmatpush1.msra.mxu0 0.0
    %1067 = vmatprep.subr.mxu0 0.0
    %1068 = vmatpush1.msra.mxu0 0.0
    %1069 = vmatprep.subr.mxu0 0.0
    %1070 = vmatpush1.msra.mxu0 0.0
    %1071 = vmatprep.subr.mxu0 0.0
    %1072 = vmatpush1.msra.mxu0 0.0
    %1073 = vmatprep.subr.mxu0 0.0
    %1074 = vmatpush1.msra.mxu0 0.0
    %1075 = vmatprep.subr.mxu0 0.0
    %1076 = vmatpush1.msra.mxu0 0.0
    %1077 = vmatprep.subr.mxu0 0.0
    %1078 = vmatpush1.msra.mxu0 0.0
    %1079 = vmatprep.subr.mxu0 0.0
    %1080 = vmatpush1.msra.mxu0 0.0
    %1081 = vmatprep.subr.mxu0 0.0
    %1082 = vmatpush1.msra.mxu0 0.0
    %1083 = vmatprep.subr.mxu0 0.0
    %1084 = vmatpush1.msra.mxu0 0.0
    %1085 = vmatprep.subr.mxu0 0.0
    %1086 = vmatpush1.msra.mxu0 0.0
    %1087 = vmatprep.subr.mxu0 0.0
    %1088 = vmatpush1.msra.mxu0 0.0
    %1089 = vmatprep.subr.mxu0 0.0
    %1090 = vmatpush1.msra.mxu0 0.0
    %1091 = vmatprep.subr.mxu0 0.0
    %1092 = vmatpush1.msra.mxu0 0.0
    %1093 = vmatprep.subr.mxu0 0.0
    %1094 = vmatpush1.msra.mxu0 0.0
    %1095 = vmatprep.subr.mxu0 0.0
    %1096 = vmatpush1.msra.mxu0 0.0
    %1097 = vmatprep.subr.mxu0 0.0
    %1098 = vmatpush1.msra.mxu0 0.0
    %1099 = vmatprep.subr.mxu0 0.0
    %1100 = vmatpush1.msra.mxu0 0.0
    %1101 = vmatprep.subr.mxu0 0.0
    %1102 = vmatpush1.msra.mxu0 0.0
    %1103 = vmatprep.subr.mxu0 0.0
    %1104 = vmatpush1.msra.mxu0 0.0
    %1105 = vmatprep.subr.mxu0 0.0
    %1106 = vmatpush1.msra.mxu0 0.0
    %1107 = vmatprep.subr.mxu0 0.0
    %1108 = vmatpush1.msra.mxu0 0.0
    %1109 = vmatprep.mubr.f32.mxu0 0.0
    %1110 = vmatmul.mubr.f32.gmra.mrb[0].mxu0 %v1043
    %v1111 = vpop.f32.mrb[0].mxu0
    %v1112 = vadd.f32 0.0, %v1111
    %v1113 = vpop.f32.mrb[0].mxu0
    %1114 = vdwg.mxu0
    %v1116 = vrot.slane %v1112, 6
    %v1118 = vadd.f32 %v934, %v1116
    %v1119 = vxor.u32 %v1118, 2147483648
    %v1120 = vmul.f32 %v1119, 1.442695
    %v1121 = vpow.pop %v1120
    %v1122 = vadd.f32 %v1121, 1.0
    %v1123 = vrcp.pop %v1122
    %v1124 = vmul.f32 1.0, %v1123
    %v1125 = vtanh.pop %v1118
    %v1127 = vrot.slane %v1033, 6
    %v1129 = vmul.f32 %v1124, %v1127
    %1131 = vrot.lane.b32.xlu0 %v1125, 104
    %v1132 = vpop.permute.xlu0 %1131
    %v1134 = vmul.f32 %v1124, %v1132
    %1136 = vrot.lane.b32.xlu0 %v1134, 8
    %v1137 = vpop.permute.xlu0 %1136
    %v1139 = vadd.f32 %v1129, %v1137
    %v1140 = vtanh.pop %v1139
    %1142 = vrot.lane.b32.xlu0 %v1140, 8
    %v1143 = vpop.permute.xlu0 %1142
    %v1145 = vmul.f32 %v1124, %v1143
    %v1147 = vrot.slane %v1145, 2
    %1148 = vrot.lane.b32.xlu0 %v1147, 112
    %v1149 = vpop.permute.xlu0 %1148
    %v1150 = vsel %vm229, %v1149, 0
    %1152 = vmatprep.subr.mxu0 0.0
    %1153 = vmatpush1.msra.mxu0 %v848
    %1154 = vmatprep.subr.mxu0 0.0
    %1155 = vmatpush1.msra.mxu0 0.0
    %1156 = vmatprep.subr.mxu0 0.0
    %1157 = vmatpush1.msra.mxu0 0.0
    %1158 = vmatprep.subr.mxu0 0.0
    %1159 = vmatpush1.msra.mxu0 0.0
    %1160 = vmatprep.subr.mxu0 0.0
    %1161 = vmatpush1.msra.mxu0 0.0
    %1162 = vmatprep.subr.mxu0 0.0
    %1163 = vmatpush1.msra.mxu0 0.0
    %1164 = vmatprep.subr.mxu0 0.0
    %1165 = vmatpush1.msra.mxu0 0.0
    %1166 = vmatprep.subr.mxu0 0.0
    %1167 = vmatpush1.msra.mxu0 0.0
    %1168 = vmatprep.subr.mxu0 0.0
    %1169 = vmatpush1.msra.mxu0 0.0
    %1170 = vmatprep.subr.mxu0 0.0
    %1171 = vmatpush1.msra.mxu0 0.0
    %1172 = vmatprep.subr.mxu0 0.0
    %1173 = vmatpush1.msra.mxu0 0.0
    %1174 = vmatprep.subr.mxu0 0.0
    %1175 = vmatpush1.msra.mxu0 0.0
    %1176 = vmatprep.subr.mxu0 0.0
    %1177 = vmatpush1.msra.mxu0 0.0
    %1178 = vmatprep.subr.mxu0 0.0
    %1179 = vmatpush1.msra.mxu0 0.0
    %1180 = vmatprep.subr.mxu0 0.0
    %1181 = vmatpush1.msra.mxu0 0.0
    %1182 = vmatprep.subr.mxu0 0.0
    %1183 = vmatpush1.msra.mxu0 0.0
    %1184 = vmatprep.subr.mxu0 0.0
    %1185 = vmatpush1.msra.mxu0 0.0
    %1186 = vmatprep.subr.mxu0 0.0
    %1187 = vmatpush1.msra.mxu0 0.0
    %1188 = vmatprep.subr.mxu0 0.0
    %1189 = vmatpush1.msra.mxu0 0.0
    %1190 = vmatprep.subr.mxu0 0.0
    %1191 = vmatpush1.msra.mxu0 0.0
    %1192 = vmatprep.subr.mxu0 0.0
    %1193 = vmatpush1.msra.mxu0 0.0
    %1194 = vmatprep.subr.mxu0 0.0
    %1195 = vmatpush1.msra.mxu0 0.0
    %1196 = vmatprep.subr.mxu0 0.0
    %1197 = vmatpush1.msra.mxu0 0.0
    %1198 = vmatprep.subr.mxu0 0.0
    %1199 = vmatpush1.msra.mxu0 0.0
    %1200 = vmatprep.subr.mxu0 0.0
    %1201 = vmatpush1.msra.mxu0 0.0
    %1202 = vmatprep.subr.mxu0 0.0
    %1203 = vmatpush1.msra.mxu0 0.0
    %1204 = vmatprep.subr.mxu0 0.0
    %1205 = vmatpush1.msra.mxu0 0.0
    %1206 = vmatprep.subr.mxu0 0.0
    %1207 = vmatpush1.msra.mxu0 0.0
    %1208 = vmatprep.subr.mxu0 0.0
    %1209 = vmatpush1.msra.mxu0 0.0
    %1210 = vmatprep.subr.mxu0 0.0
    %1211 = vmatpush1.msra.mxu0 0.0
    %1212 = vmatprep.subr.mxu0 0.0
    %1213 = vmatpush1.msra.mxu0 0.0
    %1214 = vmatprep.subr.mxu0 0.0
    %1215 = vmatpush1.msra.mxu0 0.0
    %1216 = vmatprep.mubr.f32.mxu0 0.0
    %1217 = vmatmul.mubr.f32.gmra.mrb[0].mxu0 %v1150
    %v1218 = vpop.f32.mrb[0].mxu0
    %v1219 = vadd.f32 0.0, %v1218
    %v1220 = vpop.f32.mrb[0].mxu0
    %1221 = vdwg.mxu0
    %v1223 = vrot.slane %v1219, 4
    %v1225 = vadd.f32 %v934, %v1223
    %v1226 = vxor.u32 %v1225, 2147483648
    %v1227 = vmul.f32 %v1226, 1.442695
    %v1228 = vpow.pop %v1227
    %v1229 = vadd.f32 %v1228, 1.0
    %v1230 = vrcp.pop %v1229
    %v1231 = vmul.f32 1.0, %v1230
    %v1232 = vtanh.pop %v1225
    %v1234 = vrot.slane %v1139, 6
    %v1236 = vmul.f32 %v1231, %v1234
    %1238 = vrot.lane.b32.xlu0 %v1232, 104
    %v1239 = vpop.permute.xlu0 %1238
    %v1241 = vmul.f32 %v1231, %v1239
    %1243 = vrot.lane.b32.xlu0 %v1241, 8
    %v1244 = vpop.permute.xlu0 %1243
    %v1246 = vadd.f32 %v1236, %v1244
    %v1247 = vtanh.pop %v1246
    %1249 = vrot.lane.b32.xlu0 %v1247, 8
    %v1250 = vpop.permute.xlu0 %1249
    %v1252 = vmul.f32 %v1231, %v1250
    %v1254 = vrot.slane %v1252, 4
    %1255 = vrot.lane.b32.xlu0 %v1254, 112
    %v1256 = vpop.permute.xlu0 %1255
    %v1257 = vsel %vm229, %v1256, 0
    %1259 = vmatprep.subr.mxu0 0.0
    %1260 = vmatpush1.msra.mxu0 %v848
    %1261 = vmatprep.subr.mxu0 0.0
    %1262 = vmatpush1.msra.mxu0 0.0
    %1263 = vmatprep.subr.mxu0 0.0
    %1264 = vmatpush1.msra.mxu0 0.0
    %1265 = vmatprep.subr.mxu0 0.0
    %1266 = vmatpush1.msra.mxu0 0.0
    %1267 = vmatprep.subr.mxu0 0.0
    %1268 = vmatpush1.msra.mxu0 0.0
    %1269 = vmatprep.subr.mxu0 0.0
    %1270 = vmatpush1.msra.mxu0 0.0
    %1271 = vmatprep.subr.mxu0 0.0
    %1272 = vmatpush1.msra.mxu0 0.0
    %1273 = vmatprep.subr.mxu0 0.0
    %1274 = vmatpush1.msra.mxu0 0.0
    %1275 = vmatprep.subr.mxu0 0.0
    %1276 = vmatpush1.msra.mxu0 0.0
    %1277 = vmatprep.subr.mxu0 0.0
    %1278 = vmatpush1.msra.mxu0 0.0
    %1279 = vmatprep.subr.mxu0 0.0
    %1280 = vmatpush1.msra.mxu0 0.0
    %1281 = vmatprep.subr.mxu0 0.0
    %1282 = vmatpush1.msra.mxu0 0.0
    %1283 = vmatprep.subr.mxu0 0.0
    %1284 = vmatpush1.msra.mxu0 0.0
    %1285 = vmatprep.subr.mxu0 0.0
    %1286 = vmatpush1.msra.mxu0 0.0
    %1287 = vmatprep.subr.mxu0 0.0
    %1288 = vmatpush1.msra.mxu0 0.0
    %1289 = vmatprep.subr.mxu0 0.0
    %1290 = vmatpush1.msra.mxu0 0.0
    %1291 = vmatprep.subr.mxu0 0.0
    %1292 = vmatpush1.msra.mxu0 0.0
    %1293 = vmatprep.subr.mxu0 0.0
    %1294 = vmatpush1.msra.mxu0 0.0
    %1295 = vmatprep.subr.mxu0 0.0
    %1296 = vmatpush1.msra.mxu0 0.0
    %1297 = vmatprep.subr.mxu0 0.0
    %1298 = vmatpush1.msra.mxu0 0.0
    %1299 = vmatprep.subr.mxu0 0.0
    %1300 = vmatpush1.msra.mxu0 0.0
    %1301 = vmatprep.subr.mxu0 0.0
    %1302 = vmatpush1.msra.mxu0 0.0
    %1303 = vmatprep.subr.mxu0 0.0
    %1304 = vmatpush1.msra.mxu0 0.0
    %1305 = vmatprep.subr.mxu0 0.0
    %1306 = vmatpush1.msra.mxu0 0.0
    %1307 = vmatprep.subr.mxu0 0.0
    %1308 = vmatpush1.msra.mxu0 0.0
    %1309 = vmatprep.subr.mxu0 0.0
    %1310 = vmatpush1.msra.mxu0 0.0
    %1311 = vmatprep.subr.mxu0 0.0
    %1312 = vmatpush1.msra.mxu0 0.0
    %1313 = vmatprep.subr.mxu0 0.0
    %1314 = vmatpush1.msra.mxu0 0.0
    %1315 = vmatprep.subr.mxu0 0.0
    %1316 = vmatpush1.msra.mxu0 0.0
    %1317 = vmatprep.subr.mxu0 0.0
    %1318 = vmatpush1.msra.mxu0 0.0
    %1319 = vmatprep.subr.mxu0 0.0
    %1320 = vmatpush1.msra.mxu0 0.0
    %1321 = vmatprep.subr.mxu0 0.0
    %1322 = vmatpush1.msra.mxu0 0.0
    %1323 = vmatprep.mubr.f32.mxu0 0.0
    %1324 = vmatmul.mubr.f32.gmra.mrb[0].mxu0 %v1257
    %v1325 = vpop.f32.mrb[0].mxu0
    %v1326 = vadd.f32 0.0, %v1325
    %v1327 = vpop.f32.mrb[0].mxu0
    %1328 = vdwg.mxu0
    %v1330 = vrot.slane %v1326, 2
    %v1332 = vadd.f32 %v934, %v1330
    %v1333 = vxor.u32 %v1332, 2147483648
    %v1334 = vmul.f32 %v1333, 1.442695
    %v1335 = vpow.pop %v1334
    %v1336 = vadd.f32 %v1335, 1.0
    %v1337 = vrcp.pop %v1336
    %v1338 = vmul.f32 1.0, %v1337
    %v1339 = vtanh.pop %v1332
    %v1341 = vrot.slane %v1246, 6
    %v1343 = vmul.f32 %v1338, %v1341
    %1345 = vrot.lane.b32.xlu0 %v1339, 104
    %v1346 = vpop.permute.xlu0 %1345
    %v1348 = vmul.f32 %v1338, %v1346
    %1350 = vrot.lane.b32.xlu0 %v1348, 8
    %v1351 = vpop.permute.xlu0 %1350
    %v1353 = vadd.f32 %v1343, %v1351
    %v1354 = vtanh.pop %v1353
    %1356 = vrot.lane.b32.xlu0 %v1354, 8
    %v1357 = vpop.permute.xlu0 %1356
    %v1359 = vmul.f32 %v1338, %v1357
    %v1361 = vrot.slane %v1359, 6
    %1362 = vrot.lane.b32.xlu0 %v1361, 112
    %v1363 = vpop.permute.xlu0 %1362
    %v1364 = vsel %vm229, %v1363, 0
    %1366 = vmatprep.subr.mxu0 0.0
    %1367 = vmatpush1.msra.mxu0 %v848
    %1368 = vmatprep.subr.mxu0 0.0
    %1369 = vmatpush1.msra.mxu0 0.0
    %1370 = vmatprep.subr.mxu0 0.0
    %1371 = vmatpush1.msra.mxu0 0.0
    %1372 = vmatprep.subr.mxu0 0.0
    %1373 = vmatpush1.msra.mxu0 0.0
    %1374 = vmatprep.subr.mxu0 0.0
    %1375 = vmatpush1.msra.mxu0 0.0
    %1376 = vmatprep.subr.mxu0 0.0
    %1377 = vmatpush1.msra.mxu0 0.0
    %1378 = vmatprep.subr.mxu0 0.0
    %1379 = vmatpush1.msra.mxu0 0.0
    %1380 = vmatprep.subr.mxu0 0.0
    %1381 = vmatpush1.msra.mxu0 0.0
    %1382 = vmatprep.subr.mxu0 0.0
    %1383 = vmatpush1.msra.mxu0 0.0
    %1384 = vmatprep.subr.mxu0 0.0
    %1385 = vmatpush1.msra.mxu0 0.0
    %1386 = vmatprep.subr.mxu0 0.0
    %1387 = vmatpush1.msra.mxu0 0.0
    %1388 = vmatprep.subr.mxu0 0.0
    %1389 = vmatpush1.msra.mxu0 0.0
    %1390 = vmatprep.subr.mxu0 0.0
    %1391 = vmatpush1.msra.mxu0 0.0
    %1392 = vmatprep.subr.mxu0 0.0
    %1393 = vmatpush1.msra.mxu0 0.0
    %1394 = vmatprep.subr.mxu0 0.0
    %1395 = vmatpush1.msra.mxu0 0.0
    %1396 = vmatprep.subr.mxu0 0.0
    %1397 = vmatpush1.msra.mxu0 0.0
    %1398 = vmatprep.subr.mxu0 0.0
    %1399 = vmatpush1.msra.mxu0 0.0
    %1400 = vmatprep.subr.mxu0 0.0
    %1401 = vmatpush1.msra.mxu0 0.0
    %1402 = vmatprep.subr.mxu0 0.0
    %1403 = vmatpush1.msra.mxu0 0.0
    %1404 = vmatprep.subr.mxu0 0.0
    %1405 = vmatpush1.msra.mxu0 0.0
    %1406 = vmatprep.subr.mxu0 0.0
    %1407 = vmatpush1.msra.mxu0 0.0
    %1408 = vmatprep.subr.mxu0 0.0
    %1409 = vmatpush1.msra.mxu0 0.0
    %1410 = vmatprep.subr.mxu0 0.0
    %1411 = vmatpush1.msra.mxu0 0.0
    %1412 = vmatprep.subr.mxu0 0.0
    %1413 = vmatpush1.msra.mxu0 0.0
    %1414 = vmatprep.subr.mxu0 0.0
    %1415 = vmatpush1.msra.mxu0 0.0
    %1416 = vmatprep.subr.mxu0 0.0
    %1417 = vmatpush1.msra.mxu0 0.0
    %1418 = vmatprep.subr.mxu0 0.0
    %1419 = vmatpush1.msra.mxu0 0.0
    %1420 = vmatprep.subr.mxu0 0.0
    %1421 = vmatpush1.msra.mxu0 0.0
    %1422 = vmatprep.subr.mxu0 0.0
    %1423 = vmatpush1.msra.mxu0 0.0
    %1424 = vmatprep.subr.mxu0 0.0
    %1425 = vmatpush1.msra.mxu0 0.0
    %1426 = vmatprep.subr.mxu0 0.0
    %1427 = vmatpush1.msra.mxu0 0.0
    %1428 = vmatprep.subr.mxu0 0.0
    %1429 = vmatpush1.msra.mxu0 0.0
    %1430 = vmatprep.mubr.f32.mxu0 0.0
    %1431 = vmatmul.mubr.f32.gmra.mrb[0].mxu0 %v1364
    %v1432 = vpop.f32.mrb[0].mxu0
    %v1433 = vadd.f32 0.0, %v1432
    %v1434 = vpop.f32.mrb[0].mxu0
    %1435 = vdwg.mxu0
    %v1436 = vadd.f32 %v939, %v1433
    %v1437 = vxor.u32 %v1436, 2147483648
    %v1438 = vmul.f32 %v1437, 1.442695
    %v1439 = vpow.pop %v1438
    %v1440 = vadd.f32 %v1439, 1.0
    %v1441 = vrcp.pop %v1440
    %v1442 = vmul.f32 1.0, %v1441
    %v1443 = vtanh.pop %v1436
    %v1445 = vrot.slane %v1353, 6
    %v1447 = vmul.f32 %v1442, %v1445
    %1449 = vrot.lane.b32.xlu0 %v1443, 104
    %v1450 = vpop.permute.xlu0 %1449
    %v1452 = vmul.f32 %v1442, %v1450
    %1454 = vrot.lane.b32.xlu0 %v1452, 8
    %v1455 = vpop.permute.xlu0 %1454
    %v1457 = vadd.f32 %v1447, %v1455
    %v1458 = vtanh.pop %v1457
    %1460 = vrot.lane.b32.xlu0 %v1458, 8
    %v1461 = vpop.permute.xlu0 %1460
    %v1463 = vmul.f32 %v1442, %v1461
    %1465 = vrot.lane.b32.xlu0 %v1463, 112
    %v1466 = vpop.permute.xlu0 %1465
    %v1467 = vsel %vm229, %v1466, 0
    %1469 = vmatprep.subr.mxu0 0.0
    %1470 = vmatpush1.msra.mxu0 %v848
    %1471 = vmatprep.subr.mxu0 0.0
    %1472 = vmatpush1.msra.mxu0 0.0
    %1473 = vmatprep.subr.mxu0 0.0
    %1474 = vmatpush1.msra.mxu0 0.0
    %1475 = vmatprep.subr.mxu0 0.0
    %1476 = vmatpush1.msra.mxu0 0.0
    %1477 = vmatprep.subr.mxu0 0.0
    %1478 = vmatpush1.msra.mxu0 0.0
    %1479 = vmatprep.subr.mxu0 0.0
    %1480 = vmatpush1.msra.mxu0 0.0
    %1481 = vmatprep.subr.mxu0 0.0
    %1482 = vmatpush1.msra.mxu0 0.0
    %1483 = vmatprep.subr.mxu0 0.0
    %1484 = vmatpush1.msra.mxu0 0.0
    %1485 = vmatprep.subr.mxu0 0.0
    %1486 = vmatpush1.msra.mxu0 0.0
    %1487 = vmatprep.subr.mxu0 0.0
    %1488 = vmatpush1.msra.mxu0 0.0
    %1489 = vmatprep.subr.mxu0 0.0
    %1490 = vmatpush1.msra.mxu0 0.0
    %1491 = vmatprep.subr.mxu0 0.0
    %1492 = vmatpush1.msra.mxu0 0.0
    %1493 = vmatprep.subr.mxu0 0.0
    %1494 = vmatpush1.msra.mxu0 0.0
    %1495 = vmatprep.subr.mxu0 0.0
    %1496 = vmatpush1.msra.mxu0 0.0
    %1497 = vmatprep.subr.mxu0 0.0
    %1498 = vmatpush1.msra.mxu0 0.0
    %1499 = vmatprep.subr.mxu0 0.0
    %1500 = vmatpush1.msra.mxu0 0.0
    %1501 = vmatprep.subr.mxu0 0.0
    %1502 = vmatpush1.msra.mxu0 0.0
    %1503 = vmatprep.subr.mxu0 0.0
    %1504 = vmatpush1.msra.mxu0 0.0
    %1505 = vmatprep.subr.mxu0 0.0
    %1506 = vmatpush1.msra.mxu0 0.0
    %1507 = vmatprep.subr.mxu0 0.0
    %1508 = vmatpush1.msra.mxu0 0.0
    %1509 = vmatprep.subr.mxu0 0.0
    %1510 = vmatpush1.msra.mxu0 0.0
    %1511 = vmatprep.subr.mxu0 0.0
    %1512 = vmatpush1.msra.mxu0 0.0
    %1513 = vmatprep.subr.mxu0 0.0
    %1514 = vmatpush1.msra.mxu0 0.0
    %1515 = vmatprep.subr.mxu0 0.0
    %1516 = vmatpush1.msra.mxu0 0.0
    %1517 = vmatprep.subr.mxu0 0.0
    %1518 = vmatpush1.msra.mxu0 0.0
    %1519 = vmatprep.subr.mxu0 0.0
    %1520 = vmatpush1.msra.mxu0 0.0
    %1521 = vmatprep.subr.mxu0 0.0
    %1522 = vmatpush1.msra.mxu0 0.0
    %1523 = vmatprep.subr.mxu0 0.0
    %1524 = vmatpush1.msra.mxu0 0.0
    %1525 = vmatprep.subr.mxu0 0.0
    %1526 = vmatpush1.msra.mxu0 0.0
    %1527 = vmatprep.subr.mxu0 0.0
    %1528 = vmatpush1.msra.mxu0 0.0
    %1529 = vmatprep.subr.mxu0 0.0
    %1530 = vmatpush1.msra.mxu0 0.0
    %1531 = vmatprep.subr.mxu0 0.0
    %1532 = vmatpush1.msra.mxu0 0.0
    %1533 = vmatprep.mubr.f32.mxu0 0.0
    %1534 = vmatmul.mubr.f32.gmra.mrb[0].mxu0 %v1467
    %v1535 = vpop.f32.mrb[0].mxu0
    %v1536 = vadd.f32 0.0, %v1535
    %v1537 = vpop.f32.mrb[0].mxu0
    %1538 = vdwg.mxu0
    %v1540 = vrot.slane %v1536, 6
    %v1542 = vadd.f32 %v939, %v1540
    %v1543 = vxor.u32 %v1542, 2147483648
    %v1544 = vmul.f32 %v1543, 1.442695
    %v1545 = vpow.pop %v1544
    %v1546 = vadd.f32 %v1545, 1.0
    %v1547 = vrcp.pop %v1546
    %v1548 = vmul.f32 1.0, %v1547
    %v1549 = vtanh.pop %v1542
    %v1551 = vrot.slane %v1457, 6
    %v1553 = vmul.f32 %v1548, %v1551
    %1555 = vrot.lane.b32.xlu0 %v1549, 104
    %v1556 = vpop.permute.xlu0 %1555
    %v1558 = vmul.f32 %v1548, %v1556
    %1560 = vrot.lane.b32.xlu0 %v1558, 8
    %v1561 = vpop.permute.xlu0 %1560
    %v1563 = vadd.f32 %v1553, %v1561
    %v1564 = vtanh.pop %v1563
    %1566 = vrot.lane.b32.xlu0 %v1564, 8
    %v1567 = vpop.permute.xlu0 %1566
    %v1569 = vmul.f32 %v1548, %v1567
    %v1571 = vrot.slane %v1569, 2
    %1572 = vrot.lane.b32.xlu0 %v1571, 112
    %v1573 = vpop.permute.xlu0 %1572
    %v1574 = vsel %vm229, %v1573, 0
    %1576 = vmatprep.subr.mxu0 0.0
    %1577 = vmatpush1.msra.mxu0 %v848
    %1578 = vmatprep.subr.mxu0 0.0
    %1579 = vmatpush1.msra.mxu0 0.0
    %1580 = vmatprep.subr.mxu0 0.0
    %1581 = vmatpush1.msra.mxu0 0.0
    %1582 = vmatprep.subr.mxu0 0.0
    %1583 = vmatpush1.msra.mxu0 0.0
    %1584 = vmatprep.subr.mxu0 0.0
    %1585 = vmatpush1.msra.mxu0 0.0
    %1586 = vmatprep.subr.mxu0 0.0
    %1587 = vmatpush1.msra.mxu0 0.0
    %1588 = vmatprep.subr.mxu0 0.0
    %1589 = vmatpush1.msra.mxu0 0.0
    %1590 = vmatprep.subr.mxu0 0.0
    %1591 = vmatpush1.msra.mxu0 0.0
    %1592 = vmatprep.subr.mxu0 0.0
    %1593 = vmatpush1.msra.mxu0 0.0
    %1594 = vmatprep.subr.mxu0 0.0
    %1595 = vmatpush1.msra.mxu0 0.0
    %1596 = vmatprep.subr.mxu0 0.0
    %1597 = vmatpush1.msra.mxu0 0.0
    %1598 = vmatprep.subr.mxu0 0.0
    %1599 = vmatpush1.msra.mxu0 0.0
    %1600 = vmatprep.subr.mxu0 0.0
    %1601 = vmatpush1.msra.mxu0 0.0
    %1602 = vmatprep.subr.mxu0 0.0
    %1603 = vmatpush1.msra.mxu0 0.0
    %1604 = vmatprep.subr.mxu0 0.0
    %1605 = vmatpush1.msra.mxu0 0.0
    %1606 = vmatprep.subr.mxu0 0.0
    %1607 = vmatpush1.msra.mxu0 0.0
    %1608 = vmatprep.subr.mxu0 0.0
    %1609 = vmatpush1.msra.mxu0 0.0
    %1610 = vmatprep.subr.mxu0 0.0
    %1611 = vmatpush1.msra.mxu0 0.0
    %1612 = vmatprep.subr.mxu0 0.0
    %1613 = vmatpush1.msra.mxu0 0.0
    %1614 = vmatprep.subr.mxu0 0.0
    %1615 = vmatpush1.msra.mxu0 0.0
    %1616 = vmatprep.subr.mxu0 0.0
    %1617 = vmatpush1.msra.mxu0 0.0
    %1618 = vmatprep.subr.mxu0 0.0
    %1619 = vmatpush1.msra.mxu0 0.0
    %1620 = vmatprep.subr.mxu0 0.0
    %1621 = vmatpush1.msra.mxu0 0.0
    %1622 = vmatprep.subr.mxu0 0.0
    %1623 = vmatpush1.msra.mxu0 0.0
    %1624 = vmatprep.subr.mxu0 0.0
    %1625 = vmatpush1.msra.mxu0 0.0
    %1626 = vmatprep.subr.mxu0 0.0
    %1627 = vmatpush1.msra.mxu0 0.0
    %1628 = vmatprep.subr.mxu0 0.0
    %1629 = vmatpush1.msra.mxu0 0.0
    %1630 = vmatprep.subr.mxu0 0.0
    %1631 = vmatpush1.msra.mxu0 0.0
    %1632 = vmatprep.subr.mxu0 0.0
    %1633 = vmatpush1.msra.mxu0 0.0
    %1634 = vmatprep.subr.mxu0 0.0
    %1635 = vmatpush1.msra.mxu0 0.0
    %1636 = vmatprep.subr.mxu0 0.0
    %1637 = vmatpush1.msra.mxu0 0.0
    %1638 = vmatprep.subr.mxu0 0.0
    %1639 = vmatpush1.msra.mxu0 0.0
    %1640 = vmatprep.mubr.f32.mxu0 0.0
    %1641 = vmatmul.mubr.f32.gmra.mrb[0].mxu0 %v1574
    %v1642 = vpop.f32.mrb[0].mxu0
    %v1643 = vadd.f32 0.0, %v1642
    %v1644 = vpop.f32.mrb[0].mxu0
    %1645 = vdwg.mxu0
    %v1647 = vrot.slane %v1643, 4
    %v1649 = vadd.f32 %v939, %v1647
    %v1650 = vxor.u32 %v1649, 2147483648
    %v1651 = vmul.f32 %v1650, 1.442695
    %v1652 = vpow.pop %v1651
    %v1653 = vadd.f32 %v1652, 1.0
    %v1654 = vrcp.pop %v1653
    %v1655 = vmul.f32 1.0, %v1654
    %v1656 = vtanh.pop %v1649
    %v1658 = vrot.slane %v1563, 6
    %v1660 = vmul.f32 %v1655, %v1658
    %1662 = vrot.lane.b32.xlu0 %v1656, 104
    %v1663 = vpop.permute.xlu0 %1662
    %v1665 = vmul.f32 %v1655, %v1663
    %1667 = vrot.lane.b32.xlu0 %v1665, 8
    %v1668 = vpop.permute.xlu0 %1667
    %v1670 = vadd.f32 %v1660, %v1668
    %v1671 = vtanh.pop %v1670
    %1673 = vrot.lane.b32.xlu0 %v1671, 8
    %v1674 = vpop.permute.xlu0 %1673
    %v1676 = vmul.f32 %v1655, %v1674
    %v1677 = vsel %vm863, %v1039, %v1145
    %v1678 = vsel %vm246, %v1677, %v1252
    %v1679 = vsel %vm759, %v1678, %v1359
    %v1680 = vsel %vm863, %v1463, %v1569
    %v1681 = vsel %vm246, %v1680, %v1676
    %v1682 = vld [vmem:[#allocation2 + $0x170] sm:$0xff]
    %v1683 = vld [vmem:[#allocation2 + $0x178] sm:$0xf]
    %1686 = vrot.lane.b32.xlu0 %v1679, 112
    %v1687 = vpop.permute.xlu0 %1686
    %1688 = vrot.lane.b32.xlu0 %v1681, 112
    %v1689 = vpop.permute.xlu0 %1688
    %v1692 = vsel %vm752, %v1682, 0
    %v1695 = vsel %vm752, %v1683, 0
    %v1697 = vsel %vm759, %v1689, 0
    %1699 = vmatprep.subr.mxu0 0.0
    %1700 = vmatpush1.msra.mxu0 %v1687
    %1701 = vmatprep.subr.mxu0 0.0
    %1702 = vmatpush1.msra.mxu0 %v1697
    %1703 = vmatprep.subr.mxu0 0.0
    %1704 = vmatpush1.msra.mxu0 0.0
    %1705 = vmatprep.subr.mxu0 0.0
    %1706 = vmatpush1.msra.mxu0 0.0
    %1707 = vmatprep.subr.mxu0 0.0
    %1708 = vmatpush1.msra.mxu0 0.0
    %1709 = vmatprep.subr.mxu0 0.0
    %1710 = vmatpush1.msra.mxu0 0.0
    %1711 = vmatprep.subr.mxu0 0.0
    %1712 = vmatpush1.msra.mxu0 0.0
    %1713 = vmatprep.subr.mxu0 0.0
    %1714 = vmatpush1.msra.mxu0 0.0
    %1715 = vmatprep.subr.mxu0 0.0
    %1716 = vmatpush1.msra.mxu0 0.0
    %1717 = vmatprep.subr.mxu0 0.0
    %1718 = vmatpush1.msra.mxu0 0.0
    %1719 = vmatprep.subr.mxu0 0.0
    %1720 = vmatpush1.msra.mxu0 0.0
    %1721 = vmatprep.subr.mxu0 0.0
    %1722 = vmatpush1.msra.mxu0 0.0
    %1723 = vmatprep.subr.mxu0 0.0
    %1724 = vmatpush1.msra.mxu0 0.0
    %1725 = vmatprep.subr.mxu0 0.0
    %1726 = vmatpush1.msra.mxu0 0.0
    %1727 = vmatprep.subr.mxu0 0.0
    %1728 = vmatpush1.msra.mxu0 0.0
    %1729 = vmatprep.subr.mxu0 0.0
    %1730 = vmatpush1.msra.mxu0 0.0
    %1731 = vmatprep.subr.mxu0 0.0
    %1732 = vmatpush1.msra.mxu0 0.0
    %1733 = vmatprep.subr.mxu0 0.0
    %1734 = vmatpush1.msra.mxu0 0.0
    %1735 = vmatprep.subr.mxu0 0.0
    %1736 = vmatpush1.msra.mxu0 0.0
    %1737 = vmatprep.subr.mxu0 0.0
    %1738 = vmatpush1.msra.mxu0 0.0
    %1739 = vmatprep.subr.mxu0 0.0
    %1740 = vmatpush1.msra.mxu0 0.0
    %1741 = vmatprep.subr.mxu0 0.0
    %1742 = vmatpush1.msra.mxu0 0.0
    %1743 = vmatprep.subr.mxu0 0.0
    %1744 = vmatpush1.msra.mxu0 0.0
    %1745 = vmatprep.subr.mxu0 0.0
    %1746 = vmatpush1.msra.mxu0 0.0
    %1747 = vmatprep.subr.mxu0 0.0
    %1748 = vmatpush1.msra.mxu0 0.0
    %1749 = vmatprep.subr.mxu0 0.0
    %1750 = vmatpush1.msra.mxu0 0.0
    %1751 = vmatprep.subr.mxu0 0.0
    %1752 = vmatpush1.msra.mxu0 0.0
    %1753 = vmatprep.subr.mxu0 0.0
    %1754 = vmatpush1.msra.mxu0 0.0
    %1755 = vmatprep.subr.mxu0 0.0
    %1756 = vmatpush1.msra.mxu0 0.0
    %1757 = vmatprep.subr.mxu0 0.0
    %1758 = vmatpush1.msra.mxu0 0.0
    %1759 = vmatprep.subr.mxu0 0.0
    %1760 = vmatpush1.msra.mxu0 0.0
    %1761 = vmatprep.subr.mxu0 0.0
    %1762 = vmatpush1.msra.mxu0 0.0
    %1763 = vmatprep.mubr.f32.mxu0 0.0
    %1764 = vmatmul.mubr.f32.gmra.mrb[0].mxu0 %v1692
    %v1765 = vpop.f32.mrb[0].mxu0
    %v1766 = vadd.f32 0.0, %v1765
    %v1767 = vpop.f32.mrb[0].mxu0
    %1768 = vmatprep.mubr.f32.mxu0 0.0
    %1769 = vmatmul.mubr.f32.gmra.mrb[0].mxu0 %v1695
    %v1770 = vpop.f32.mrb[0].mxu0
    %v1771 = vadd.f32 0.0, %v1770
    %v1772 = vpop.f32.mrb[0].mxu0
    %1773 = vdwg.mxu0
    %v1774 = vld [vmem:[#allocation2 + $0x180] sm:$0xff]
    %v1775 = vld [vmem:[#allocation2 + $0x188] sm:$0xf]
    %v1777 = vsel %vm752, %v1774, 0
    %v1780 = vsel %vm752, %v1775, 0
    %1782 = vmatprep.subr.mxu0 0.0
    %1783 = vmatpush1.msra.mxu0 %v1687
    %1784 = vmatprep.subr.mxu0 0.0
    %1785 = vmatpush1.msra.mxu0 %v1697
    %1786 = vmatprep.subr.mxu0 0.0
    %1787 = vmatpush1.msra.mxu0 0.0
    %1788 = vmatprep.subr.mxu0 0.0
    %1789 = vmatpush1.msra.mxu0 0.0
    %1790 = vmatprep.subr.mxu0 0.0
    %1791 = vmatpush1.msra.mxu0 0.0
    %1792 = vmatprep.subr.mxu0 0.0
    %1793 = vmatpush1.msra.mxu0 0.0
    %1794 = vmatprep.subr.mxu0 0.0
    %1795 = vmatpush1.msra.mxu0 0.0
    %1796 = vmatprep.subr.mxu0 0.0
    %1797 = vmatpush1.msra.mxu0 0.0
    %1798 = vmatprep.subr.mxu0 0.0
    %1799 = vmatpush1.msra.mxu0 0.0
    %1800 = vmatprep.subr.mxu0 0.0
    %1801 = vmatpush1.msra.mxu0 0.0
    %1802 = vmatprep.subr.mxu0 0.0
    %1803 = vmatpush1.msra.mxu0 0.0
    %1804 = vmatprep.subr.mxu0 0.0
    %1805 = vmatpush1.msra.mxu0 0.0
    %1806 = vmatprep.subr.mxu0 0.0
    %1807 = vmatpush1.msra.mxu0 0.0
    %1808 = vmatprep.subr.mxu0 0.0
    %1809 = vmatpush1.msra.mxu0 0.0
    %1810 = vmatprep.subr.mxu0 0.0
    %1811 = vmatpush1.msra.mxu0 0.0
    %1812 = vmatprep.subr.mxu0 0.0
    %1813 = vmatpush1.msra.mxu0 0.0
    %1814 = vmatprep.subr.mxu0 0.0
    %1815 = vmatpush1.msra.mxu0 0.0
    %1816 = vmatprep.subr.mxu0 0.0
    %1817 = vmatpush1.msra.mxu0 0.0
    %1818 = vmatprep.subr.mxu0 0.0
    %1819 = vmatpush1.msra.mxu0 0.0
    %1820 = vmatprep.subr.mxu0 0.0
    %1821 = vmatpush1.msra.mxu0 0.0
    %1822 = vmatprep.subr.mxu0 0.0
    %1823 = vmatpush1.msra.mxu0 0.0
    %1824 = vmatprep.subr.mxu0 0.0
    %1825 = vmatpush1.msra.mxu0 0.0
    %1826 = vmatprep.subr.mxu0 0.0
    %1827 = vmatpush1.msra.mxu0 0.0
    %1828 = vmatprep.subr.mxu0 0.0
    %1829 = vmatpush1.msra.mxu0 0.0
    %1830 = vmatprep.subr.mxu0 0.0
    %1831 = vmatpush1.msra.mxu0 0.0
    %1832 = vmatprep.subr.mxu0 0.0
    %1833 = vmatpush1.msra.mxu0 0.0
    %1834 = vmatprep.subr.mxu0 0.0
    %1835 = vmatpush1.msra.mxu0 0.0
    %1836 = vmatprep.subr.mxu0 0.0
    %1837 = vmatpush1.msra.mxu0 0.0
    %1838 = vmatprep.subr.mxu0 0.0
    %1839 = vmatpush1.msra.mxu0 0.0
    %1840 = vmatprep.subr.mxu0 0.0
    %1841 = vmatpush1.msra.mxu0 0.0
    %1842 = vmatprep.subr.mxu0 0.0
    %1843 = vmatpush1.msra.mxu0 0.0
    %1844 = vmatprep.subr.mxu0 0.0
    %1845 = vmatpush1.msra.mxu0 0.0
    %1846 = vmatprep.mubr.f32.mxu0 0.0
    %1847 = vmatmul.mubr.f32.gmra.mrb[0].mxu0 %v1777
    %v1848 = vpop.f32.mrb[0].mxu0
    %v1849 = vadd.f32 0.0, %v1848
    %v1850 = vpop.f32.mrb[0].mxu0
    %1851 = vmatprep.mubr.f32.mxu0 0.0
    %1852 = vmatmul.mubr.f32.gmra.mrb[0].mxu0 %v1780
    %v1853 = vpop.f32.mrb[0].mxu0
    %v1854 = vadd.f32 0.0, %v1853
    %v1855 = vpop.f32.mrb[0].mxu0
    %1856 = vdwg.mxu0
    %v1857 = vld [vmem:[#allocation2 + $0x120] sm:$0xff]
    %v1859 = vsel %vm229, %v1766, 0
    %v1862 = vsel %vm229, %v1771, 0
    %1864 = vmatprep.subr.mxu0 0.0
    %1865 = vmatpush1.msra.mxu0 %v1857
    %1866 = vmatprep.subr.mxu0 0.0
    %1867 = vmatpush1.msra.mxu0 0.0
    %1868 = vmatprep.subr.mxu0 0.0
    %1869 = vmatpush1.msra.mxu0 0.0
    %1870 = vmatprep.subr.mxu0 0.0
    %1871 = vmatpush1.msra.mxu0 0.0
    %1872 = vmatprep.subr.mxu0 0.0
    %1873 = vmatpush1.msra.mxu0 0.0
    %1874 = vmatprep.subr.mxu0 0.0
    %1875 = vmatpush1.msra.mxu0 0.0
    %1876 = vmatprep.subr.mxu0 0.0
    %1877 = vmatpush1.msra.mxu0 0.0
    %1878 = vmatprep.subr.mxu0 0.0
    %1879 = vmatpush1.msra.mxu0 0.0
    %1880 = vmatprep.subr.mxu0 0.0
    %1881 = vmatpush1.msra.mxu0 0.0
    %1882 = vmatprep.subr.mxu0 0.0
    %1883 = vmatpush1.msra.mxu0 0.0
    %1884 = vmatprep.subr.mxu0 0.0
    %1885 = vmatpush1.msra.mxu0 0.0
    %1886 = vmatprep.subr.mxu0 0.0
    %1887 = vmatpush1.msra.mxu0 0.0
    %1888 = vmatprep.subr.mxu0 0.0
    %1889 = vmatpush1.msra.mxu0 0.0
    %1890 = vmatprep.subr.mxu0 0.0
    %1891 = vmatpush1.msra.mxu0 0.0
    %1892 = vmatprep.subr.mxu0 0.0
    %1893 = vmatpush1.msra.mxu0 0.0
    %1894 = vmatprep.subr.mxu0 0.0
    %1895 = vmatpush1.msra.mxu0 0.0
    %1896 = vmatprep.subr.mxu0 0.0
    %1897 = vmatpush1.msra.mxu0 0.0
    %1898 = vmatprep.subr.mxu0 0.0
    %1899 = vmatpush1.msra.mxu0 0.0
    %1900 = vmatprep.subr.mxu0 0.0
    %1901 = vmatpush1.msra.mxu0 0.0
    %1902 = vmatprep.subr.mxu0 0.0
    %1903 = vmatpush1.msra.mxu0 0.0
    %1904 = vmatprep.subr.mxu0 0.0
    %1905 = vmatpush1.msra.mxu0 0.0
    %1906 = vmatprep.subr.mxu0 0.0
    %1907 = vmatpush1.msra.mxu0 0.0
    %1908 = vmatprep.subr.mxu0 0.0
    %1909 = vmatpush1.msra.mxu0 0.0
    %1910 = vmatprep.subr.mxu0 0.0
    %1911 = vmatpush1.msra.mxu0 0.0
    %1912 = vmatprep.subr.mxu0 0.0
    %1913 = vmatpush1.msra.mxu0 0.0
    %1914 = vmatprep.subr.mxu0 0.0
    %1915 = vmatpush1.msra.mxu0 0.0
    %1916 = vmatprep.subr.mxu0 0.0
    %1917 = vmatpush1.msra.mxu0 0.0
    %1918 = vmatprep.subr.mxu0 0.0
    %1919 = vmatpush1.msra.mxu0 0.0
    %1920 = vmatprep.subr.mxu0 0.0
    %1921 = vmatpush1.msra.mxu0 0.0
    %1922 = vmatprep.subr.mxu0 0.0
    %1923 = vmatpush1.msra.mxu0 0.0
    %1924 = vmatprep.subr.mxu0 0.0
    %1925 = vmatpush1.msra.mxu0 0.0
    %1926 = vmatprep.subr.mxu0 0.0
    %1927 = vmatpush1.msra.mxu0 0.0
    %1928 = vmatprep.mubr.f32.mxu0 0.0
    %1929 = vmatmul.mubr.f32.gmra.mrb[0].mxu0 %v1859
    %v1930 = vpop.f32.mrb[0].mxu0
    %v1931 = vadd.f32 0.0, %v1930
    %v1932 = vpop.f32.mrb[0].mxu0
    %1933 = vmatprep.mubr.f32.mxu0 0.0
    %1934 = vmatmul.mubr.f32.gmra.mrb[0].mxu0 %v1862
    %v1935 = vpop.f32.mrb[0].mxu0
    %v1936 = vadd.f32 0.0, %v1935
    %v1937 = vpop.f32.mrb[0].mxu0
    %1938 = vdwg.mxu0
    %v1939 = vld [vmem:[#allocation2 + $0x128] sm:$0xff]
    %v1941 = vsel %vm229, %v1849, 0
    %v1944 = vsel %vm229, %v1854, 0
    %1946 = vmatprep.subr.mxu0 0.0
    %1947 = vmatpush1.msra.mxu0 %v1939
    %1948 = vmatprep.subr.mxu0 0.0
    %1949 = vmatpush1.msra.mxu0 0.0
    %1950 = vmatprep.subr.mxu0 0.0
    %1951 = vmatpush1.msra.mxu0 0.0
    %1952 = vmatprep.subr.mxu0 0.0
    %1953 = vmatpush1.msra.mxu0 0.0
    %1954 = vmatprep.subr.mxu0 0.0
    %1955 = vmatpush1.msra.mxu0 0.0
    %1956 = vmatprep.subr.mxu0 0.0
    %1957 = vmatpush1.msra.mxu0 0.0
    %1958 = vmatprep.subr.mxu0 0.0
    %1959 = vmatpush1.msra.mxu0 0.0
    %1960 = vmatprep.subr.mxu0 0.0
    %1961 = vmatpush1.msra.mxu0 0.0
    %1962 = vmatprep.subr.mxu0 0.0
    %1963 = vmatpush1.msra.mxu0 0.0
    %1964 = vmatprep.subr.mxu0 0.0
    %1965 = vmatpush1.msra.mxu0 0.0
    %1966 = vmatprep.subr.mxu0 0.0
    %1967 = vmatpush1.msra.mxu0 0.0
    %1968 = vmatprep.subr.mxu0 0.0
    %1969 = vmatpush1.msra.mxu0 0.0
    %1970 = vmatprep.subr.mxu0 0.0
    %1971 = vmatpush1.msra.mxu0 0.0
    %1972 = vmatprep.subr.mxu0 0.0
    %1973 = vmatpush1.msra.mxu0 0.0
    %1974 = vmatprep.subr.mxu0 0.0
    %1975 = vmatpush1.msra.mxu0 0.0
    %1976 = vmatprep.subr.mxu0 0.0
    %1977 = vmatpush1.msra.mxu0 0.0
    %1978 = vmatprep.subr.mxu0 0.0
    %1979 = vmatpush1.msra.mxu0 0.0
    %1980 = vmatprep.subr.mxu0 0.0
    %1981 = vmatpush1.msra.mxu0 0.0
    %1982 = vmatprep.subr.mxu0 0.0
    %1983 = vmatpush1.msra.mxu0 0.0
    %1984 = vmatprep.subr.mxu0 0.0
    %1985 = vmatpush1.msra.mxu0 0.0
    %1986 = vmatprep.subr.mxu0 0.0
    %1987 = vmatpush1.msra.mxu0 0.0
    %1988 = vmatprep.subr.mxu0 0.0
    %1989 = vmatpush1.msra.mxu0 0.0
    %1990 = vmatprep.subr.mxu0 0.0
    %1991 = vmatpush1.msra.mxu0 0.0
    %1992 = vmatprep.subr.mxu0 0.0
    %1993 = vmatpush1.msra.mxu0 0.0
    %1994 = vmatprep.subr.mxu0 0.0
    %1995 = vmatpush1.msra.mxu0 0.0
    %1996 = vmatprep.subr.mxu0 0.0
    %1997 = vmatpush1.msra.mxu0 0.0
    %1998 = vmatprep.subr.mxu0 0.0
    %1999 = vmatpush1.msra.mxu0 0.0
    %2000 = vmatprep.subr.mxu0 0.0
    %2001 = vmatpush1.msra.mxu0 0.0
    %2002 = vmatprep.subr.mxu0 0.0
    %2003 = vmatpush1.msra.mxu0 0.0
    %2004 = vmatprep.subr.mxu0 0.0
    %2005 = vmatpush1.msra.mxu0 0.0
    %2006 = vmatprep.subr.mxu0 0.0
    %2007 = vmatpush1.msra.mxu0 0.0
    %2008 = vmatprep.subr.mxu0 0.0
    %2009 = vmatpush1.msra.mxu0 0.0
    %2010 = vmatprep.mubr.f32.mxu0 0.0
    %2011 = vmatmul.mubr.f32.gmra.mrb[0].mxu0 %v1941
    %v2012 = vpop.f32.mrb[0].mxu0
    %v2013 = vadd.f32 0.0, %v2012
    %v2014 = vpop.f32.mrb[0].mxu0
    %2015 = vmatprep.mubr.f32.mxu0 0.0
    %2016 = vmatmul.mubr.f32.gmra.mrb[0].mxu0 %v1944
    %v2017 = vpop.f32.mrb[0].mxu0
    %v2018 = vadd.f32 0.0, %v2017
    %v2019 = vpop.f32.mrb[0].mxu0
    %2020 = vdwg.mxu0
    %v2021 = vmul.f32 %v1931, %v2013
    %v2022 = vmul.f32 %v1936, %v2018
    %v2023 = vld [vmem:[#allocation2 + $0x190] sm:$0x3]
    %v2024 = vld [vmem:[#allocation2 + $0x130] sm:$0xff]
    %v2025 = vld [vmem:[#allocation2 + $0x138] sm:$0xff]
    %v2026 = vld [vmem:[#allocation2 + $0x140] sm:$0xff]
    %v2027 = vld [vmem:[#allocation2 + $0x148] sm:$0xff]
    %v2028 = vld [vmem:[#allocation2 + $0x150] sm:$0xff]
    %v2029 = vld [vmem:[#allocation2 + $0x158] sm:$0xff]
    %v2030 = vld [vmem:[#allocation2 + $0x160] sm:$0xff]
    %v2031 = vld [vmem:[#allocation2 + $0x168] sm:$0xff]
    %vm2032 = vcmask 523264
    %v2034 = vsel %vm2032, %v2021, 0
    %v2037 = vsel %vm2032, %v2022, 0
    %2039 = vmatprep.subr.mxu0 0.0
    %2040 = vmatpush1.msra.mxu0 %v2024
    %2041 = vmatprep.subr.mxu0 0.0
    %2042 = vmatpush1.msra.mxu0 %v2025
    %2043 = vmatprep.subr.mxu0 0.0
    %2044 = vmatpush1.msra.mxu0 %v2026
    %2045 = vmatprep.subr.mxu0 0.0
    %2046 = vmatpush1.msra.mxu0 %v2027
    %2047 = vmatprep.subr.mxu0 0.0
    %2048 = vmatpush1.msra.mxu0 %v2028
    %2049 = vmatprep.subr.mxu0 0.0
    %2050 = vmatpush1.msra.mxu0 %v2029
    %2051 = vmatprep.subr.mxu0 0.0
    %2052 = vmatpush1.msra.mxu0 %v2030
    %2053 = vmatprep.subr.mxu0 0.0
    %2054 = vmatpush1.msra.mxu0 %v2031
    %2055 = vmatprep.subr.mxu0 0.0
    %2056 = vmatpush1.msra.mxu0 0.0
    %2057 = vmatprep.subr.mxu0 0.0
    %2058 = vmatpush1.msra.mxu0 0.0
    %2059 = vmatprep.subr.mxu0 0.0
    %2060 = vmatpush1.msra.mxu0 0.0
    %2061 = vmatprep.subr.mxu0 0.0
    %2062 = vmatpush1.msra.mxu0 0.0
    %2063 = vmatprep.subr.mxu0 0.0
    %2064 = vmatpush1.msra.mxu0 0.0
    %2065 = vmatprep.subr.mxu0 0.0
    %2066 = vmatpush1.msra.mxu0 0.0
    %2067 = vmatprep.subr.mxu0 0.0
    %2068 = vmatpush1.msra.mxu0 0.0
    %2069 = vmatprep.subr.mxu0 0.0
    %2070 = vmatpush1.msra.mxu0 0.0
    %2071 = vmatprep.subr.mxu0 0.0
    %2072 = vmatpush1.msra.mxu0 0.0
    %2073 = vmatprep.subr.mxu0 0.0
    %2074 = vmatpush1.msra.mxu0 0.0
    %2075 = vmatprep.subr.mxu0 0.0
    %2076 = vmatpush1.msra.mxu0 0.0
    %2077 = vmatprep.subr.mxu0 0.0
    %2078 = vmatpush1.msra.mxu0 0.0
    %2079 = vmatprep.subr.mxu0 0.0
    %2080 = vmatpush1.msra.mxu0 0.0
    %2081 = vmatprep.subr.mxu0 0.0
    %2082 = vmatpush1.msra.mxu0 0.0
    %2083 = vmatprep.subr.mxu0 0.0
    %2084 = vmatpush1.msra.mxu0 0.0
    %2085 = vmatprep.subr.mxu0 0.0
    %2086 = vmatpush1.msra.mxu0 0.0
    %2087 = vmatprep.subr.mxu0 0.0
    %2088 = vmatpush1.msra.mxu0 0.0
    %2089 = vmatprep.subr.mxu0 0.0
    %2090 = vmatpush1.msra.mxu0 0.0
    %2091 = vmatprep.subr.mxu0 0.0
    %2092 = vmatpush1.msra.mxu0 0.0
    %2093 = vmatprep.subr.mxu0 0.0
    %2094 = vmatpush1.msra.mxu0 0.0
    %2095 = vmatprep.subr.mxu0 0.0
    %2096 = vmatpush1.msra.mxu0 0.0
    %2097 = vmatprep.subr.mxu0 0.0
    %2098 = vmatpush1.msra.mxu0 0.0
    %2099 = vmatprep.subr.mxu0 0.0
    %2100 = vmatpush1.msra.mxu0 0.0
    %2101 = vmatprep.subr.mxu0 0.0
    %2102 = vmatpush1.msra.mxu0 0.0
    %2103 = vmatprep.mubr.f32.mxu0 0.0
    %2104 = vmatmul.mubr.f32.gmra.mrb[0].mxu0 %v2034
    %v2105 = vpop.f32.mrb[0].mxu0
    %v2106 = vadd.f32 0.0, %v2105
    %v2107 = vpop.f32.mrb[0].mxu0
    %2108 = vmatprep.mubr.f32.mxu0 0.0
    %2109 = vmatmul.mubr.f32.gmra.mrb[0].mxu0 %v2037
    %v2110 = vpop.f32.mrb[0].mxu0
    %v2111 = vadd.f32 0.0, %v2110
    %v2112 = vpop.f32.mrb[0].mxu0
    %2113 = vdwg.mxu0
    %v2115 = vsel %vm239, %v2023, 0
    %v2118 = vsel %vm246, %v2111, 0
    %2120 = vmatprep.subr.mxu0 0.0
    %2121 = vmatpush1.msra.mxu0 %v2106
    %2122 = vmatprep.subr.mxu0 0.0
    %2123 = vmatpush1.msra.mxu0 %v2118
    %2124 = vmatprep.subr.mxu0 0.0
    %2125 = vmatpush1.msra.mxu0 0.0
    %2126 = vmatprep.subr.mxu0 0.0
    %2127 = vmatpush1.msra.mxu0 0.0
    %2128 = vmatprep.subr.mxu0 0.0
    %2129 = vmatpush1.msra.mxu0 0.0
    %2130 = vmatprep.subr.mxu0 0.0
    %2131 = vmatpush1.msra.mxu0 0.0
    %2132 = vmatprep.subr.mxu0 0.0
    %2133 = vmatpush1.msra.mxu0 0.0
    %2134 = vmatprep.subr.mxu0 0.0
    %2135 = vmatpush1.msra.mxu0 0.0
    %2136 = vmatprep.subr.mxu0 0.0
    %2137 = vmatpush1.msra.mxu0 0.0
    %2138 = vmatprep.subr.mxu0 0.0
    %2139 = vmatpush1.msra.mxu0 0.0
    %2140 = vmatprep.subr.mxu0 0.0
    %2141 = vmatpush1.msra.mxu0 0.0
    %2142 = vmatprep.subr.mxu0 0.0
    %2143 = vmatpush1.msra.mxu0 0.0
    %2144 = vmatprep.subr.mxu0 0.0
    %2145 = vmatpush1.msra.mxu0 0.0
    %2146 = vmatprep.subr.mxu0 0.0
    %2147 = vmatpush1.msra.mxu0 0.0
    %2148 = vmatprep.subr.mxu0 0.0
    %2149 = vmatpush1.msra.mxu0 0.0
    %2150 = vmatprep.subr.mxu0 0.0
    %2151 = vmatpush1.msra.mxu0 0.0
    %2152 = vmatprep.subr.mxu0 0.0
    %2153 = vmatpush1.msra.mxu0 0.0
    %2154 = vmatprep.subr.mxu0 0.0
    %2155 = vmatpush1.msra.mxu0 0.0
    %2156 = vmatprep.subr.mxu0 0.0
    %2157 = vmatpush1.msra.mxu0 0.0
    %2158 = vmatprep.subr.mxu0 0.0
    %2159 = vmatpush1.msra.mxu0 0.0
    %2160 = vmatprep.subr.mxu0 0.0
    %2161 = vmatpush1.msra.mxu0 0.0
    %2162 = vmatprep.subr.mxu0 0.0
    %2163 = vmatpush1.msra.mxu0 0.0
    %2164 = vmatprep.subr.mxu0 0.0
    %2165 = vmatpush1.msra.mxu0 0.0
    %2166 = vmatprep.subr.mxu0 0.0
    %2167 = vmatpush1.msra.mxu0 0.0
    %2168 = vmatprep.subr.mxu0 0.0
    %2169 = vmatpush1.msra.mxu0 0.0
    %2170 = vmatprep.subr.mxu0 0.0
    %2171 = vmatpush1.msra.mxu0 0.0
    %2172 = vmatprep.subr.mxu0 0.0
    %2173 = vmatpush1.msra.mxu0 0.0
    %2174 = vmatprep.subr.mxu0 0.0
    %2175 = vmatpush1.msra.mxu0 0.0
    %2176 = vmatprep.subr.mxu0 0.0
    %2177 = vmatpush1.msra.mxu0 0.0
    %2178 = vmatprep.subr.mxu0 0.0
    %2179 = vmatpush1.msra.mxu0 0.0
    %2180 = vmatprep.subr.mxu0 0.0
    %2181 = vmatpush1.msra.mxu0 0.0
    %2182 = vmatprep.subr.mxu0 0.0
    %2183 = vmatpush1.msra.mxu0 0.0
    %2184 = vmatprep.mubr.f32.mxu0 0.0
    %2185 = vmatmul.mubr.f32.gmra.mrb[0].mxu0 %v2115
    %v2186 = vpop.f32.mrb[0].mxu0
    %v2187 = vadd.f32 0.0, %v2186
    %v2188 = vpop.f32.mrb[0].mxu0
    %2189 = vdwg.mxu0
    %v2190 = vrot.slane %v1039, 4
    %v2192 = vsub.f32 %v1676, %v2190
    %2194 = vrot.lane.b32.xlu0 %v2192, 112
    %v2195 = vpop.permute.xlu0 %2194
    %v2198 = vrot.slane %v2187, 4
    %2199 = vrot.lane.b32.xlu0 %v2198, 8
    %v2200 = vpop.permute.xlu0 %2199
    %v2202 = vsel %vm229, %v2195, %v2200
    %vm2205 = vcmask 1045509
    %v2206 = vsel %vm2205, %v42, %v35
    %2207 = vrot.lane.b32.xlu0 %v2206, 32
    %v2208 = vpop.permute.xlu0 %2207
    %vm2210 = vcmask 293888
    %v2211 = vsel %vm2210, %v2202, %v2208
    %v2212 = vld [vmem:[#allocation2 + $0x38] sm:$0xff]
    %v2213 = vld [vmem:[#allocation2 + $0x40] sm:$0xff]
    %v2214 = vld [vmem:[#allocation2 + $0x48] sm:$0xff]
    %v2215 = vld [vmem:[#allocation2 + $0x50] sm:$0xff]
    %v2216 = vld [vmem:[#allocation2 + $0x58] sm:$0x7f]
    %v2217 = vld [vmem:[#allocation2 + $0x60] sm:$0x1]
    %v2218 = vlaneseq
    %v2219 = vshrl.u32 %v2218, 7
    %v2220 = vsub.s32 0, %v2219
    %v2221 = vrot.slane %v2217, %v2220
    %v2223 = vrot.slane %v2211, 4
    %vm2224 = vcmask 318464
    %v2225 = vsel %vm2224, %v2223, 0
    %vm2227 = vcmask 1046528
    %v2229 = vsel %vm2227, %v2216, 0
    %2231 = vmatprep.subr.mxu0 0.0
    %2232 = vmatpush1.msra.mxu0 %v2212
    %2233 = vmatprep.subr.mxu0 0.0
    %2234 = vmatpush1.msra.mxu0 %v2213
    %2235 = vmatprep.subr.mxu0 0.0
    %2236 = vmatpush1.msra.mxu0 %v2214
    %2237 = vmatprep.subr.mxu0 0.0
    %2238 = vmatpush1.msra.mxu0 %v2215
    %2239 = vmatprep.subr.mxu0 0.0
    %2240 = vmatpush1.msra.mxu0 %v2229
    %2241 = vmatprep.subr.mxu0 0.0
    %2242 = vmatpush1.msra.mxu0 0.0
    %2243 = vmatprep.subr.mxu0 0.0
    %2244 = vmatpush1.msra.mxu0 0.0
    %2245 = vmatprep.subr.mxu0 0.0
    %2246 = vmatpush1.msra.mxu0 0.0
    %2247 = vmatprep.subr.mxu0 0.0
    %2248 = vmatpush1.msra.mxu0 0.0
    %2249 = vmatprep.subr.mxu0 0.0
    %2250 = vmatpush1.msra.mxu0 0.0
    %2251 = vmatprep.subr.mxu0 0.0
    %2252 = vmatpush1.msra.mxu0 0.0
    %2253 = vmatprep.subr.mxu0 0.0
    %2254 = vmatpush1.msra.mxu0 0.0
    %2255 = vmatprep.subr.mxu0 0.0
    %2256 = vmatpush1.msra.mxu0 0.0
    %2257 = vmatprep.subr.mxu0 0.0
    %2258 = vmatpush1.msra.mxu0 0.0
    %2259 = vmatprep.subr.mxu0 0.0
    %2260 = vmatpush1.msra.mxu0 0.0
    %2261 = vmatprep.subr.mxu0 0.0
    %2262 = vmatpush1.msra.mxu0 0.0
    %2263 = vmatprep.subr.mxu0 0.0
    %2264 = vmatpush1.msra.mxu0 0.0
    %2265 = vmatprep.subr.mxu0 0.0
    %2266 = vmatpush1.msra.mxu0 0.0
    %2267 = vmatprep.subr.mxu0 0.0
    %2268 = vmatpush1.msra.mxu0 0.0
    %2269 = vmatprep.subr.mxu0 0.0
    %2270 = vmatpush1.msra.mxu0 0.0
    %2271 = vmatprep.subr.mxu0 0.0
    %2272 = vmatpush1.msra.mxu0 0.0
    %2273 = vmatprep.subr.mxu0 0.0
    %2274 = vmatpush1.msra.mxu0 0.0
    %2275 = vmatprep.subr.mxu0 0.0
    %2276 = vmatpush1.msra.mxu0 0.0
    %2277 = vmatprep.subr.mxu0 0.0
    %2278 = vmatpush1.msra.mxu0 0.0
    %2279 = vmatprep.subr.mxu0 0.0
    %2280 = vmatpush1.msra.mxu0 0.0
    %2281 = vmatprep.subr.mxu0 0.0
    %2282 = vmatpush1.msra.mxu0 0.0
    %2283 = vmatprep.subr.mxu0 0.0
    %2284 = vmatpush1.msra.mxu0 0.0
    %2285 = vmatprep.subr.mxu0 0.0
    %2286 = vmatpush1.msra.mxu0 0.0
    %2287 = vmatprep.subr.mxu0 0.0
    %2288 = vmatpush1.msra.mxu0 0.0
    %2289 = vmatprep.subr.mxu0 0.0
    %2290 = vmatpush1.msra.mxu0 0.0
    %2291 = vmatprep.subr.mxu0 0.0
    %2292 = vmatpush1.msra.mxu0 0.0
    %2293 = vmatprep.subr.mxu0 0.0
    %2294 = vmatpush1.msra.mxu0 0.0
    %2295 = vmatprep.mubr.f32.mxu0 0.0
    %2296 = vmatmul.mubr.f32.gmra.mrb[0].mxu0 %v2225
    %v2297 = vpop.f32.mrb[0].mxu0
    %v2298 = vadd.f32 %v2221, %v2297
    %v2299 = vpop.f32.mrb[0].mxu0
    %2300 = vdwg.mxu0
    %v2301 = vtanh.pop %v2298
    %v2302 = vld [vmem:[#allocation2 + $0x68] sm:$0x1]
    %v2303 = vlaneseq
    %v2304 = vshrl.u32 %v2303, 7
    %v2305 = vsub.s32 0, %v2304
    %v2306 = vrot.slane %v2302, %v2305
    %v2307 = vmul.f32 %v2301, %v2306
    %v2308 = vld [vmem:[#allocation2 + $0x70] sm:$0x3f]
    %v2309 = vld [vmem:[#allocation2 + $0x78] sm:$0x1]
    %v2310 = vlaneseq
    %v2311 = vshrl.u32 %v2310, 7
    %v2312 = vsub.s32 0, %v2311
    %v2313 = vrot.slane %v2309, %v2312
    %vm2314 = vcmask 48128
    %v2316 = vsel %vm2314, %v2307, 0
    %v2319 = vsel %vm759, %v2308, 0
    %2321 = vmatprep.subr.mxu0 0.0
    %2322 = vmatpush1.msra.mxu0 %v2319
    %2323 = vmatprep.subr.mxu0 0.0
    %2324 = vmatpush1.msra.mxu0 0.0
    %2325 = vmatprep.subr.mxu0 0.0
    %2326 = vmatpush1.msra.mxu0 0.0
    %2327 = vmatprep.subr.mxu0 0.0
    %2328 = vmatpush1.msra.mxu0 0.0
    %2329 = vmatprep.subr.mxu0 0.0
    %2330 = vmatpush1.msra.mxu0 0.0
    %2331 = vmatprep.subr.mxu0 0.0
    %2332 = vmatpush1.msra.mxu0 0.0
    %2333 = vmatprep.subr.mxu0 0.0
    %2334 = vmatpush1.msra.mxu0 0.0
    %2335 = vmatprep.subr.mxu0 0.0
    %2336 = vmatpush1.msra.mxu0 0.0
    %2337 = vmatprep.subr.mxu0 0.0
    %2338 = vmatpush1.msra.mxu0 0.0
    %2339 = vmatprep.subr.mxu0 0.0
    %2340 = vmatpush1.msra.mxu0 0.0
    %2341 = vmatprep.subr.mxu0 0.0
    %2342 = vmatpush1.msra.mxu0 0.0
    %2343 = vmatprep.subr.mxu0 0.0
    %2344 = vmatpush1.msra.mxu0 0.0
    %2345 = vmatprep.subr.mxu0 0.0
    %2346 = vmatpush1.msra.mxu0 0.0
    %2347 = vmatprep.subr.mxu0 0.0
    %2348 = vmatpush1.msra.mxu0 0.0
    %2349 = vmatprep.subr.mxu0 0.0
    %2350 = vmatpush1.msra.mxu0 0.0
    %2351 = vmatprep.subr.mxu0 0.0
    %2352 = vmatpush1.msra.mxu0 0.0
    %2353 = vmatprep.subr.mxu0 0.0
    %2354 = vmatpush1.msra.mxu0 0.0
    %2355 = vmatprep.subr.mxu0 0.0
    %2356 = vmatpush1.msra.mxu0 0.0
    %2357 = vmatprep.subr.mxu0 0.0
    %2358 = vmatpush1.msra.mxu0 0.0
    %2359 = vmatprep.subr.mxu0 0.0
    %2360 = vmatpush1.msra.mxu0 0.0
    %2361 = vmatprep.subr.mxu0 0.0
    %2362 = vmatpush1.msra.mxu0 0.0
    %2363 = vmatprep.subr.mxu0 0.0
    %2364 = vmatpush1.msra.mxu0 0.0
    %2365 = vmatprep.subr.mxu0 0.0
    %2366 = vmatpush1.msra.mxu0 0.0
    %2367 = vmatprep.subr.mxu0 0.0
    %2368 = vmatpush1.msra.mxu0 0.0
    %2369 = vmatprep.subr.mxu0 0.0
    %2370 = vmatpush1.msra.mxu0 0.0
    %2371 = vmatprep.subr.mxu0 0.0
    %2372 = vmatpush1.msra.mxu0 0.0
    %2373 = vmatprep.subr.mxu0 0.0
    %2374 = vmatpush1.msra.mxu0 0.0
    %2375 = vmatprep.subr.mxu0 0.0
    %2376 = vmatpush1.msra.mxu0 0.0
    %2377 = vmatprep.subr.mxu0 0.0
    %2378 = vmatpush1.msra.mxu0 0.0
    %2379 = vmatprep.subr.mxu0 0.0
    %2380 = vmatpush1.msra.mxu0 0.0
    %2381 = vmatprep.subr.mxu0 0.0
    %2382 = vmatpush1.msra.mxu0 0.0
    %2383 = vmatprep.subr.mxu0 0.0
    %2384 = vmatpush1.msra.mxu0 0.0
    %2385 = vmatprep.mubr.f32.mxu0 0.0
    %2386 = vmatmul.mubr.f32.gmra.mrb[0].mxu0 %v2316
    %v2387 = vpop.f32.mrb[0].mxu0
    %v2388 = vadd.f32 %v2313, %v2387
    %v2389 = vpop.f32.mrb[0].mxu0
    %2390 = vdwg.mxu0
    %v2391 = vmax.f32 %v2388, 0.0
    %v2392 = vld [vmem:[#allocation2 + $0x80] sm:$0xff]
    %v2393 = vld [vmem:[#allocation2 + $0x88] sm:$0xff]
    %v2394 = vld [vmem:[#allocation2 + $0x90] sm:$0x1]
    %v2395 = vlaneseq
    %v2396 = vshrl.u32 %v2395, 7
    %v2397 = vsub.s32 0, %v2396
    %v2398 = vrot.slane %v2394, %v2397
    %v2400 = vsel %vm45, %v2391, 0
    %2402 = vmatprep.subr.mxu0 0.0
    %2403 = vmatpush1.msra.mxu0 %v2392
    %2404 = vmatprep.subr.mxu0 0.0
    %2405 = vmatpush1.msra.mxu0 %v2393
    %2406 = vmatprep.subr.mxu0 0.0
    %2407 = vmatpush1.msra.mxu0 0.0
    %2408 = vmatprep.subr.mxu0 0.0
    %2409 = vmatpush1.msra.mxu0 0.0
    %2410 = vmatprep.subr.mxu0 0.0
    %2411 = vmatpush1.msra.mxu0 0.0
    %2412 = vmatprep.subr.mxu0 0.0
    %2413 = vmatpush1.msra.mxu0 0.0
    %2414 = vmatprep.subr.mxu0 0.0
    %2415 = vmatpush1.msra.mxu0 0.0
    %2416 = vmatprep.subr.mxu0 0.0
    %2417 = vmatpush1.msra.mxu0 0.0
    %2418 = vmatprep.subr.mxu0 0.0
    %2419 = vmatpush1.msra.mxu0 0.0
    %2420 = vmatprep.subr.mxu0 0.0
    %2421 = vmatpush1.msra.mxu0 0.0
    %2422 = vmatprep.subr.mxu0 0.0
    %2423 = vmatpush1.msra.mxu0 0.0
    %2424 = vmatprep.subr.mxu0 0.0
    %2425 = vmatpush1.msra.mxu0 0.0
    %2426 = vmatprep.subr.mxu0 0.0
    %2427 = vmatpush1.msra.mxu0 0.0
    %2428 = vmatprep.subr.mxu0 0.0
    %2429 = vmatpush1.msra.mxu0 0.0
    %2430 = vmatprep.subr.mxu0 0.0
    %2431 = vmatpush1.msra.mxu0 0.0
    %2432 = vmatprep.subr.mxu0 0.0
    %2433 = vmatpush1.msra.mxu0 0.0
    %2434 = vmatprep.subr.mxu0 0.0
    %2435 = vmatpush1.msra.mxu0 0.0
    %2436 = vmatprep.subr.mxu0 0.0
    %2437 = vmatpush1.msra.mxu0 0.0
    %2438 = vmatprep.subr.mxu0 0.0
    %2439 = vmatpush1.msra.mxu0 0.0
    %2440 = vmatprep.subr.mxu0 0.0
    %2441 = vmatpush1.msra.mxu0 0.0
    %2442 = vmatprep.subr.mxu0 0.0
    %2443 = vmatpush1.msra.mxu0 0.0
    %2444 = vmatprep.subr.mxu0 0.0
    %2445 = vmatpush1.msra.mxu0 0.0
    %2446 = vmatprep.subr.mxu0 0.0
    %2447 = vmatpush1.msra.mxu0 0.0
    %2448 = vmatprep.subr.mxu0 0.0
    %2449 = vmatpush1.msra.mxu0 0.0
    %2450 = vmatprep.subr.mxu0 0.0
    %2451 = vmatpush1.msra.mxu0 0.0
    %2452 = vmatprep.subr.mxu0 0.0
    %2453 = vmatpush1.msra.mxu0 0.0
    %2454 = vmatprep.subr.mxu0 0.0
    %2455 = vmatpush1.msra.mxu0 0.0
    %2456 = vmatprep.subr.mxu0 0.0
    %2457 = vmatpush1.msra.mxu0 0.0
    %2458 = vmatprep.subr.mxu0 0.0
    %2459 = vmatpush1.msra.mxu0 0.0
    %2460 = vmatprep.subr.mxu0 0.0
    %2461 = vmatpush1.msra.mxu0 0.0
    %2462 = vmatprep.subr.mxu0 0.0
    %2463 = vmatpush1.msra.mxu0 0.0
    %2464 = vmatprep.subr.mxu0 0.0
    %2465 = vmatpush1.msra.mxu0 0.0
    %2466 = vmatprep.mubr.f32.mxu0 0.0
    %2467 = vmatmul.mubr.f32.gmra.mrb[0].mxu0 %v2400
    %v2468 = vpop.f32.mrb[0].mxu0
    %v2469 = vadd.f32 %v2398, %v2468
    %v2470 = vpop.f32.mrb[0].mxu0
    %2471 = vdwg.mxu0
    %v2472 = vmax.f32 %v2469, 0.0
    %v2473 = vld [vmem:[#allocation2 + $0x98] sm:$0xff]
    %v2474 = vld [vmem:[#allocation2 + $0xa0] sm:$0xff]
    %v2475 = vld [vmem:[#allocation2 + $0xa8] sm:$0x1]
    %v2476 = vlaneseq
    %v2477 = vshrl.u32 %v2476, 7
    %v2478 = vsub.s32 0, %v2477
    %v2479 = vrot.slane %v2475, %v2478
    %v2481 = vsel %vm45, %v2472, 0
    %2483 = vmatprep.subr.mxu0 0.0
    %2484 = vmatpush1.msra.mxu0 %v2473
    %2485 = vmatprep.subr.mxu0 0.0
    %2486 = vmatpush1.msra.mxu0 %v2474
    %2487 = vmatprep.subr.mxu0 0.0
    %2488 = vmatpush1.msra.mxu0 0.0
    %2489 = vmatprep.subr.mxu0 0.0
    %2490 = vmatpush1.msra.mxu0 0.0
    %2491 = vmatprep.subr.mxu0 0.0
    %2492 = vmatpush1.msra.mxu0 0.0
    %2493 = vmatprep.subr.mxu0 0.0
    %2494 = vmatpush1.msra.mxu0 0.0
    %2495 = vmatprep.subr.mxu0 0.0
    %2496 = vmatpush1.msra.mxu0 0.0
    %2497 = vmatprep.subr.mxu0 0.0
    %2498 = vmatpush1.msra.mxu0 0.0
    %2499 = vmatprep.subr.mxu0 0.0
    %2500 = vmatpush1.msra.mxu0 0.0
    %2501 = vmatprep.subr.mxu0 0.0
    %2502 = vmatpush1.msra.mxu0 0.0
    %2503 = vmatprep.subr.mxu0 0.0
    %2504 = vmatpush1.msra.mxu0 0.0
    %2505 = vmatprep.subr.mxu0 0.0
    %2506 = vmatpush1.msra.mxu0 0.0
    %2507 = vmatprep.subr.mxu0 0.0
    %2508 = vmatpush1.msra.mxu0 0.0
    %2509 = vmatprep.subr.mxu0 0.0
    %2510 = vmatpush1.msra.mxu0 0.0
    %2511 = vmatprep.subr.mxu0 0.0
    %2512 = vmatpush1.msra.mxu0 0.0
    %2513 = vmatprep.subr.mxu0 0.0
    %2514 = vmatpush1.msra.mxu0 0.0
    %2515 = vmatprep.subr.mxu0 0.0
    %2516 = vmatpush1.msra.mxu0 0.0
    %2517 = vmatprep.subr.mxu0 0.0
    %2518 = vmatpush1.msra.mxu0 0.0
    %2519 = vmatprep.subr.mxu0 0.0
    %2520 = vmatpush1.msra.mxu0 0.0
    %2521 = vmatprep.subr.mxu0 0.0
    %2522 = vmatpush1.msra.mxu0 0.0
    %2523 = vmatprep.subr.mxu0 0.0
    %2524 = vmatpush1.msra.mxu0 0.0
    %2525 = vmatprep.subr.mxu0 0.0
    %2526 = vmatpush1.msra.mxu0 0.0
    %2527 = vmatprep.subr.mxu0 0.0
    %2528 = vmatpush1.msra.mxu0 0.0
    %2529 = vmatprep.subr.mxu0 0.0
    %2530 = vmatpush1.msra.mxu0 0.0
    %2531 = vmatprep.subr.mxu0 0.0
    %2532 = vmatpush1.msra.mxu0 0.0
    %2533 = vmatprep.subr.mxu0 0.0
    %2534 = vmatpush1.msra.mxu0 0.0
    %2535 = vmatprep.subr.mxu0 0.0
    %2536 = vmatpush1.msra.mxu0 0.0
    %2537 = vmatprep.subr.mxu0 0.0
    %2538 = vmatpush1.msra.mxu0 0.0
    %2539 = vmatprep.subr.mxu0 0.0
    %2540 = vmatpush1.msra.mxu0 0.0
    %2541 = vmatprep.subr.mxu0 0.0
    %2542 = vmatpush1.msra.mxu0 0.0
    %2543 = vmatprep.subr.mxu0 0.0
    %2544 = vmatpush1.msra.mxu0 0.0
    %2545 = vmatprep.subr.mxu0 0.0
    %2546 = vmatpush1.msra.mxu0 0.0
    %2547 = vmatprep.mubr.f32.mxu0 0.0
    %2548 = vmatmul.mubr.f32.gmra.mrb[0].mxu0 %v2481
    %v2549 = vpop.f32.mrb[0].mxu0
    %v2550 = vadd.f32 %v2479, %v2549
    %v2551 = vpop.f32.mrb[0].mxu0
    %2552 = vdwg.mxu0
    %vm2553 = vcmask 17408
    %2554 = vst.msk [vmem:[#allocation5] sm:$0x3] %vm2553, %v2550
    // Predicated region
    $region14: #{stacked_deepsignet_forward.1} parent=1 // pred_check
      _
    $region15: #{stacked_deepsignet_forward.1} parent=1 // pred_check_branch
      %2556 = sbr.rel (0) target = $region17
    $region16: #{stacked_deepsignet_forward.1} parent=1 // pred_region
      %s2558 = ssub.s32 32, 32
      %2559 = vsyncadd [#allocation4], %s2558
      %s2561 = sshll.u32 [#allocation5], 4
      %s2562 = int_to_ptr.vmem [resolvable:$true] %s2561
      %2564 = dma.vmem_to_hbm [thread:$0]  %s2562, 32, %s2, [#allocation4]
    $region17: #{stacked_deepsignet_forward.1} parent=1 // pred_fallthru
      _
    // Predicated region
    $region18: #{stacked_deepsignet_forward.1} parent=1 // pred_check
      _
    $region19: #{stacked_deepsignet_forward.1} parent=1 // pred_check_branch
      %2566 = sbr.rel (0) target = $region21
    $region20: #{stacked_deepsignet_forward.1} parent=1 // pred_region
      %2567 = dma.done [#allocation4], 32
    $region21: #{stacked_deepsignet_forward.1} parent=1 // pred_fallthru
      _
    %2568 = vsyncpa [#allocation3], 1
    %2569 = vsyncpa [#allocation4], 1

</llo_original>
